<compile_context>
chip_gen: v5e
topology: v5e:2x2
jax: 0.10.0
libtpu: 0.0.40
codegen_flags: <defaults>
</compile_context>

<pallas_src>
import functools

import jax
import jax.numpy as jnp
import numpy as np
from jax.experimental import pallas as pl
from jax.experimental.pallas import tpu as pltpu

_MIB = 1024 * 1024


def eslm_kge_kernel(enc_ref, kg_ref,
                    w1_enc_ref, w1_kg_ref, b1_ref,
                    w2_ref, b2_ref,
                    w3_ref, b3_ref,
                    out_ref, acc_ref, *, inv_s, seq_len, s_tile, needs_mask):
    """Grid: (cdiv(S, s_tile),) over the sequence (reduction) axis."""
    s = pl.program_id(0)
    last = pl.num_programs(0) - 1

    @pl.when(s == 0)
    def _init():
        acc_ref[...] = jnp.zeros_like(acc_ref)

    # Running f32 sum over the sequence axis (mean-pool numerator) of the
    # streamed encoder tile.
    # TODO(synk): if xprof shows the cast+sum VPU slot co-critical on v7x
    # (3.2 TB/s HBM), offload the pool to the otherwise-idle MXU via
    # einsum('bs,bsf->bf', ones/mask_row, enc_tile).
    if needs_mask:
        @pl.when(s < last)
        def _full_tile():
            acc_ref[...] += jnp.sum(enc_ref[...].astype(jnp.float32), axis=1)

        @pl.when(s == last)
        def _tail_tile():
            rows_left = seq_len - s * s_tile
            row_ids = jax.lax.broadcasted_iota(jnp.int32, enc_ref.shape, 1)
            tile = jnp.where(row_ids < rows_left,
                             enc_ref[...].astype(jnp.float32),
                             jnp.float32(0.0))
            acc_ref[...] += jnp.sum(tile, axis=1)
    else:
        acc_ref[...] += jnp.sum(enc_ref[...].astype(jnp.float32), axis=1)

    @pl.when(s == last)
    def _finalize():
        pooled_enc = acc_ref[...] * inv_s                       # (B, F)
        kg = kg_ref[...].astype(jnp.float32)                    # (B, K)
        # pooled = [mean_S(enc), kg] (mean over S of the constant kg part is
        # kg itself).  attn = softmax over a size-1 axis == 1.0 exactly, so
        # combined_output == pooled; the attention branch is dead compute and
        # is omitted (valid only while the attention projection stays 1-wide).
        # concat is eliminated: pooled @ w1 == pooled_enc @ w1[:F] + kg @ w1[F:]
        h1 = jnp.maximum(
            jnp.dot(pooled_enc, w1_enc_ref[...],
                    preferred_element_type=jnp.float32)
            + jnp.dot(kg, w1_kg_ref[...],
                      preferred_element_type=jnp.float32)
            + b1_ref[...],
            0.0)                                                # (B, H)
        h2 = jnp.maximum(
            jnp.dot(h1, w2_ref[...], preferred_element_type=jnp.float32)
            + b2_ref[...],
            0.0)                                                # (B, H)

        # Final 1-wide projection emitted lane-dense as a (1, B) row.
        # dot_general contracts the H axis of both operands directly, so no
        # XLU transpose / VMEM copy of h2 is materialized in the epilogue.
        # (b3 is a scalar and cancels in the batch softmax, but is kept — one
        #  scalar add from SMEM.)
        logits = jax.lax.dot_general(
            w3_ref[...], h2,
            dimension_numbers=(((1,), (1,)), ((), ())),
            preferred_element_type=jnp.float32) + b3_ref[0, 0]  # (1, B)

        # softmax over the batch (lane axis of the (1, B) row).
        m = jnp.max(logits, axis=-1, keepdims=True)
        e = jnp.exp(logits - m)
        out_ref[...] = e / jnp.sum(e, axis=-1, keepdims=True)


def _vmem_budget_bytes():
    """Generation-aware scoped-VMEM budget (v7x has only 64 MiB physical)."""
    try:
        cap = getattr(pltpu.get_tpu_info(), "vmem_capacity_bytes", None)
    except Exception:
        cap = None
    if not cap:
        return 32 * _MIB                       # conservative, safe on every gen
    return int(min(0.7 * cap, 64 * _MIB))      # ~45 MiB on v7x, 64 MiB on v5e/v6e


def eslm_kge_forward(encoder_output, kg_embeddings, params, *,
                     s_tile=None, vmem_limit_bytes=None, enc_buffers=2):
    """encoder_output: (B, S, F); kg_embeddings: (B, 1, K).

    Weights are stored transposed vs. PyTorch, i.e. (in_features, out_features),
    so y = x @ W + b.
    """
    B, S, F = encoder_output.shape
    K = kg_embeddings.shape[-1]
    H = params["w2"].shape[0]

    # Stream the encoder output in whatever dtype the producer emitted.  A
    # standalone wrapper-side bf16 cast would ADD HBM traffic (4B read + 2B
    # write + 2B kernel read > 4B kernel read); if the encoder natively emits
    # bf16 the stream is bf16 automatically.
    enc = encoder_output
    itemsize = jnp.dtype(enc.dtype).itemsize
    kg2d = kg_embeddings.reshape(B, K).astype(jnp.float32)

    # Pre-split w1 so the kernel never materializes a lane-misaligned concat.
    w1_enc = params["w1"][:F]                 # (F, H)
    w1_kg = params["w1"][F:]                  # (K, H)
    w3_row = params["w3"].reshape(1, H)       # (1, H)
    b3 = params["b3"].reshape(1, 1)           # scalar -> SMEM

    if vmem_limit_bytes is None:
        vmem_limit_bytes = _vmem_budget_bytes()

    # ---- sequence-tile sizing ------------------------------------------------
    # bf16 packs 2 rows per sublane -> multiples of 16; f32 -> multiples of 8.
    align = 16 if itemsize == 2 else 8
    if s_tile is None:
        f32b = 4
        resident = (B * K + F * H + K * H + H * H + 3 * H) * f32b
        acc_bytes = B * F * f32b
        # Budget = scoped limit minus resident operands (assume worst-case
        # double buffering if single-buffering is rejected) minus slack.
        budget = vmem_limit_bytes - 2 * resident - acc_bytes - 2 * _MIB
        per_row = max(1, B * F * itemsize)
        nbuf = max(2, enc_buffers)
        s_fit = budget // (nbuf * per_row)
        s_cap = (8 * _MIB) // per_row          # ~4-8 MiB per encoder tile
        s_tile = int(max(align, min(s_fit, s_cap)))
        s_tile = max(align, (s_tile // align) * align)
    else:
        s_tile = int(s_tile)

    if s_tile >= S:
        s_tile = S                             # single full-extent tile (legal)
    elif s_tile % 8 != 0:
        s_tile = max(8, (s_tile // 8) * 8)     # (8,128) second-minor constraint

    grid_s = int(pl.cdiv(S, s_tile))
    needs_mask = (S % s_tile) != 0

    kernel = functools.partial(
        eslm_kge_kernel, inv_s=1.0 / S, seq_len=S, s_tile=s_tile,
        needs_mask=needs_mask)

    if enc_buffers == 2:
        enc_spec = pl.BlockSpec((B, s_tile, F), lambda s: (0, s, 0))
    else:
        # With many short grid steps, a 3rd buffer hides DMA-issue latency.
        enc_spec = pl.BlockSpec((B, s_tile, F), lambda s: (0, s, 0),
                                pipeline_mode=pl.Buffered(enc_buffers))

    def _resident(shape, single_buffer):
        n = len(shape)
        if single_buffer:
            # Constant index_map -> DMA'd once; Buffered(1) also reclaims the
            # dead second pipeline buffer (~10 MiB of weights at prod sizes).
            return pl.BlockSpec(shape, lambda s: (0,) * n,
                                pipeline_mode=pl.Buffered(1))
        return pl.BlockSpec(shape, lambda s: (0,) * n)

    def _build(single_buffer_weights):
        in_specs = [
            enc_spec,                                            # streamed enc tiles
            _resident((B, K), single_buffer_weights),            # kg embeddings
            _resident((F, H), single_buffer_weights),            # w1[:F]
            _resident((K, H), single_buffer_weights),            # w1[F:]
            _resident((1, H), single_buffer_weights),            # b1
            _resident((H, H), single_buffer_weights),            # w2
            _resident((1, H), single_buffer_weights),            # b2
            _resident((1, H), single_buffer_weights),            # w3 (row)
            pl.BlockSpec(memory_space=pltpu.MemorySpace.SMEM),   # b3 scalar
        ]
        return pl.pallas_call(
            kernel,
            out_shape=jax.ShapeDtypeStruct((1, B), jnp.float32),
            grid=(grid_s,),
            in_specs=in_specs,
            out_specs=pl.BlockSpec((1, B), lambda s: (0, 0)),
            scratch_shapes=[pltpu.VMEM((B, F), jnp.float32)],    # mean-pool acc
            compiler_params=pltpu.CompilerParams(
                dimension_semantics=("arbitrary",),              # S is a reduction
                vmem_limit_bytes=int(vmem_limit_bytes)),
        )

    args = (enc, kg2d, w1_enc, w1_kg, params["b1"],
            params["w2"], params["b2"], w3_row, b3)

    # TODO(synk): on v7x (2 TensorCores) add a leading "parallel" grid axis
    # splitting F (per-core (B, F/2) accumulators) once a single TC is shown
    # not to saturate the 3.2 TB/s HBM roofline.
    try:
        out = jax.block_until_ready(_build(True)(*args))
    except Exception:
        # pl.Buffered(1) rejected by this jax/mosaic build -> fall back to the
        # default double-buffered resident weights (correctness unaffected).
        out = _build(False)(*args)

    return out.reshape(B, 1)   # back to the module's (B, 1) output shape


def reference_forward(encoder_output, kg_embeddings, params):
    """Pure-JAX reference of the PyTorch forward (post-encoder), incl. the
    (identity) attention branch."""
    B, S, _ = encoder_output.shape
    kg = jnp.broadcast_to(kg_embeddings, (B, S, kg_embeddings.shape[-1]))
    combined = jnp.concatenate([encoder_output, kg], axis=-1)
    pooled = jnp.mean(combined, axis=1)
    attn = jax.nn.softmax(pooled @ params["attn_w"] + params["attn_b"], axis=-1)
    c = attn * pooled
    h1 = jax.nn.relu(c @ params["w1"] + params["b1"])
    h2 = jax.nn.relu(h1 @ params["w2"] + params["b2"])
    logits = h2 @ params["w3"] + params["b3"]
    return jax.nn.softmax(logits, axis=0)


if __name__ == "__main__":
    # Small, module-consistent shapes (B a multiple of 8 sublanes, feature
    # dims lane-aligned to 128).  S=24 is deliberately NOT a multiple of the
    # explicit s_tile=16 so the masked tail-tile path is exercised.
    B, S, VOCAB = 8, 24, 64
    FEAT_DIM = 128     # stand-in for lm_encoder d_model (e.g. 768)
    KG_DIM = 128       # stand-in for kg_embedding_dim (1200 in the module)
    HIDDEN = 128       # stand-in for mlp_hidden_dim (512 in the module)
    COMB = FEAT_DIM + KG_DIM

    key = jax.random.PRNGKey(0)
    keys = jax.random.split(key, 12)

    # Deterministic parameter init (stored as (in, out), i.e. PyTorch W.T).
    params = {
        "attn_w": jax.random.normal(keys[0], (COMB, 1), jnp.float32) * 0.05,
        "attn_b": jax.random.normal(keys[1], (1, 1), jnp.float32) * 0.05,
        "w1": jax.random.normal(keys[2], (COMB, HIDDEN), jnp.float32) * 0.05,
        "b1": jax.random.normal(keys[3], (1, HIDDEN), jnp.float32) * 0.05,
        "w2": jax.random.normal(keys[4], (HIDDEN, HIDDEN), jnp.float32) * 0.05,
        "b2": jax.random.normal(keys[5], (1, HIDDEN), jnp.float32) * 0.05,
        "w3": jax.random.normal(keys[6], (HIDDEN, 1), jnp.float32) * 0.05,
        "b3": jax.random.normal(keys[7], (1, 1), jnp.float32) * 0.05,
    }

    # Inputs.
    input_ids = jax.random.randint(keys[8], (B, S), 0, VOCAB)
    attention_mask = jnp.ones((B, S), jnp.int32)
    kg_embeddings = jax.random.normal(keys[9], (B, 1, KG_DIM), jnp.float32)

    # TODO(synk): the pretrained LM encoder (T5EncoderModel / AutoModel) has no
    # Pallas equivalent; it is replaced by a deterministic embedding lookup.
    emb_table = jax.random.normal(keys[10], (VOCAB, FEAT_DIM), jnp.float32) * 0.1
    encoder_output = (emb_table[input_ids]
                      * attention_mask[..., None].astype(jnp.float32))
    # Streamed as f32 — no standalone bf16 cast pass (would add HBM traffic).

    ref = reference_forward(encoder_output, kg_embeddings, params)

    # (a) explicit s_tile=16 -> 2-step pipelined grid with a masked tail tile.
    out_tiled = jax.block_until_ready(
        eslm_kge_forward(encoder_output, kg_embeddings, params, s_tile=16))
    np.testing.assert_allclose(np.asarray(out_tiled), np.asarray(ref),
                               rtol=1e-4, atol=1e-6)

    # (b) auto-derived s_tile / generation-aware VMEM budget (collapses to a
    #     single full-extent tile at this toy size).
    out_auto = jax.block_until_ready(
        eslm_kge_forward(encoder_output, kg_embeddings, params))
    np.testing.assert_allclose(np.asarray(out_auto), np.asarray(ref),
                               rtol=1e-4, atol=1e-6)

    print("KERNEL_OK")
</pallas_src>

<mosaic_0001>
module attributes {stable_mosaic.version = 11 : i64} {
  func.func @eslm_kge_kernel(%arg0: i32, %arg1: memref<8x16x128xf32, #tpu.memory_space<vmem>>, %arg2: memref<8x128xf32, #tpu.memory_space<vmem>>, %arg3: memref<128x128xf32, #tpu.memory_space<vmem>>, %arg4: memref<128x128xf32, #tpu.memory_space<vmem>>, %arg5: memref<1x128xf32, #tpu.memory_space<vmem>>, %arg6: memref<128x128xf32, #tpu.memory_space<vmem>>, %arg7: memref<1x128xf32, #tpu.memory_space<vmem>>, %arg8: memref<1x128xf32, #tpu.memory_space<vmem>>, %arg9: memref<1x1xf32, #tpu.memory_space<smem>>, %arg10: memref<1x8xf32, #tpu.memory_space<vmem>>, %arg11: memref<8x128xf32, #tpu.memory_space<vmem>>) attributes {dimension_semantics = [#tpu.dimension_semantics<arbitrary>], iteration_bounds = array<i64: 2>, scalar_prefetch = 0 : i64, scratch_operands = 1 : i64, tpu.core_type = #tpu.core_type<tc>, window_params = [{transform_indices = @transform_0, window_bounds = array<i64: 8, 16, 128>}, {pipeline_mode = #tpu.pipeline_mode<synchronous>, transform_indices = @transform_1, window_bounds = array<i64: 8, 128>}, {pipeline_mode = #tpu.pipeline_mode<synchronous>, transform_indices = @transform_2, window_bounds = array<i64: 128, 128>}, {pipeline_mode = #tpu.pipeline_mode<synchronous>, transform_indices = @transform_3, window_bounds = array<i64: 128, 128>}, {pipeline_mode = #tpu.pipeline_mode<synchronous>, transform_indices = @transform_4, window_bounds = array<i64: 1, 128>}, {pipeline_mode = #tpu.pipeline_mode<synchronous>, transform_indices = @transform_5, window_bounds = array<i64: 128, 128>}, {pipeline_mode = #tpu.pipeline_mode<synchronous>, transform_indices = @transform_6, window_bounds = array<i64: 1, 128>}, {pipeline_mode = #tpu.pipeline_mode<synchronous>, transform_indices = @transform_7, window_bounds = array<i64: 1, 128>}, {transform_indices = @transform_8, window_bounds = array<i64: 1, 1>}, {pipeline_mode = #tpu.pipeline_mode<synchronous>, transform_indices = @transform_9, window_bounds = array<i64: 1, 8>}]} {
    %c0_i32 = arith.constant 0 : i32
    %0 = arith.cmpi eq, %arg0, %c0_i32 : i32
    %1 = arith.extui %0 : i1 to i32
    %c0_i32_0 = arith.constant 0 : i32
    %2 = arith.cmpi ne, %1, %c0_i32_0 : i32
    scf.if %2 {
      %cst = arith.constant 0.000000e+00 : f32
      %12 = vector.broadcast %cst : f32 to vector<8x128xf32>
      %c0 = arith.constant 0 : index
      %c0_6 = arith.constant 0 : index
      %13 = vector.load %arg11[%c0, %c0_6] : memref<8x128xf32, #tpu.memory_space<vmem>>, vector<8x128xf32>
      tpu.vector_store %arg11[%c0, %c0_6], %12 {strides = array<i32>} : memref<8x128xf32, #tpu.memory_space<vmem>>, vector<8x128xf32>,
    } else {
    }
    %c1_i32 = arith.constant 1 : i32
    %3 = arith.cmpi slt, %arg0, %c1_i32 : i32
    %4 = arith.extui %3 : i1 to i32
    %c0_i32_1 = arith.constant 0 : i32
    %5 = arith.cmpi ne, %4, %c0_i32_1 : i32
    scf.if %5 {
      %c0 = arith.constant 0 : index
      %c0_6 = arith.constant 0 : index
      %12 = vector.load %arg11[%c0, %c0_6] : memref<8x128xf32, #tpu.memory_space<vmem>>, vector<8x128xf32>
      %c0_7 = arith.constant 0 : index
      %c0_8 = arith.constant 0 : index
      %c0_9 = arith.constant 0 : index
      %13 = vector.load %arg1[%c0_7, %c0_8, %c0_9] : memref<8x16x128xf32, #tpu.memory_space<vmem>>, vector<8x16x128xf32>
      %cst = arith.constant dense<0.000000e+00> : vector<8x128xf32>
      %14 = vector.multi_reduction <add>, %13, %cst [1] : vector<8x16x128xf32> to vector<8x128xf32>
      %15 = arith.addf %12, %14 : vector<8x128xf32>
      %c0_10 = arith.constant 0 : index
      %c0_11 = arith.constant 0 : index
      %16 = vector.load %arg11[%c0_10, %c0_11] : memref<8x128xf32, #tpu.memory_space<vmem>>, vector<8x128xf32>
      tpu.vector_store %arg11[%c0_10, %c0_11], %15 {strides = array<i32>} : memref<8x128xf32, #tpu.memory_space<vmem>>, vector<8x128xf32>,
    } else {
    }
    %c1_i32_2 = arith.constant 1 : i32
    %6 = arith.cmpi eq, %arg0, %c1_i32_2 : i32
    %7 = arith.extui %6 : i1 to i32
    %c0_i32_3 = arith.constant 0 : i32
    %8 = arith.cmpi ne, %7, %c0_i32_3 : i32
    scf.if %8 {
      %c16_i32 = arith.constant 16 : i32
      %12 = arith.muli %arg0, %c16_i32 : i32
      %c24_i32 = arith.constant 24 : i32
      %13 = arith.subi %c24_i32, %12 : i32
      %14 = tpu.iota {dimensions = array<i32: 1>} : vector<8x16x128xi32>
      %15 = vector.broadcast %13 : i32 to vector<8x16x128xi32>
      %16 = arith.cmpi slt, %14, %15 : vector<8x16x128xi32>
      %c0 = arith.constant 0 : index
      %c0_6 = arith.constant 0 : index
      %c0_7 = arith.constant 0 : index
      %17 = vector.load %arg1[%c0, %c0_6, %c0_7] : memref<8x16x128xf32, #tpu.memory_space<vmem>>, vector<8x16x128xf32>
      %cst = arith.constant 0.000000e+00 : f32
      %18 = vector.broadcast %cst : f32 to vector<8x16x128xf32>
      %19 = arith.select %16, %17, %18 : vector<8x16x128xi1>, vector<8x16x128xf32>
      %c0_8 = arith.constant 0 : index
      %c0_9 = arith.constant 0 : index
      %20 = vector.load %arg11[%c0_8, %c0_9] : memref<8x128xf32, #tpu.memory_space<vmem>>, vector<8x128xf32>
      %cst_10 = arith.constant dense<0.000000e+00> : vector<8x128xf32>
      %21 = vector.multi_reduction <add>, %19, %cst_10 [1] : vector<8x16x128xf32> to vector<8x128xf32>
      %22 = arith.addf %20, %21 : vector<8x128xf32>
      %c0_11 = arith.constant 0 : index
      %c0_12 = arith.constant 0 : index
      %23 = vector.load %arg11[%c0_11, %c0_12] : memref<8x128xf32, #tpu.memory_space<vmem>>, vector<8x128xf32>
      tpu.vector_store %arg11[%c0_11, %c0_12], %22 {strides = array<i32>} : memref<8x128xf32, #tpu.memory_space<vmem>>, vector<8x128xf32>,
    } else {
    }
    %c1_i32_4 = arith.constant 1 : i32
    %9 = arith.cmpi eq, %arg0, %c1_i32_4 : i32
    %10 = arith.extui %9 : i1 to i32
    %c0_i32_5 = arith.constant 0 : i32
    %11 = arith.cmpi ne, %10, %c0_i32_5 : i32
    scf.if %11 {
      %c0 = arith.constant 0 : index
      %c0_6 = arith.constant 0 : index
      %12 = vector.load %arg11[%c0, %c0_6] : memref<8x128xf32, #tpu.memory_space<vmem>>, vector<8x128xf32>
      %cst = arith.constant 0.0416666679 : f32
      %13 = vector.broadcast %cst : f32 to vector<8x128xf32>
      %14 = arith.mulf %12, %13 : vector<8x128xf32>
      %c0_7 = arith.constant 0 : index
      %c0_8 = arith.constant 0 : index
      %15 = vector.load %arg2[%c0_7, %c0_8] : memref<8x128xf32, #tpu.memory_space<vmem>>, vector<8x128xf32>
      %c0_9 = arith.constant 0 : index
      %c0_10 = arith.constant 0 : index
      %16 = vector.load %arg3[%c0_9, %c0_10] : memref<128x128xf32, #tpu.memory_space<vmem>>, vector<128x128xf32>
      %cst_11 = arith.constant dense<0.000000e+00> : vector<8x128xf32>
      %17 = tpu.matmul %14, %16, %cst_11 {dimension_numbers = #tpu.dot_dimension_numbers<[1], [0], [0], [1], [0, 0, 1, 1], [], []>} : vector<8x128xf32>, vector<128x128xf32>, vector<8x128xf32> -> vector<8x128xf32>
      %c0_12 = arith.constant 0 : index
      %c0_13 = arith.constant 0 : index
      %18 = vector.load %arg4[%c0_12, %c0_13] : memref<128x128xf32, #tpu.memory_space<vmem>>, vector<128x128xf32>
      %cst_14 = arith.constant dense<0.000000e+00> : vector<8x128xf32>
      %19 = tpu.matmul %15, %18, %cst_14 {dimension_numbers = #tpu.dot_dimension_numbers<[1], [0], [0], [1], [0, 0, 1, 1], [], []>} : vector<8x128xf32>, vector<128x128xf32>, vector<8x128xf32> -> vector<8x128xf32>
      %20 = arith.addf %17, %19 : vector<8x128xf32>
      %c0_15 = arith.constant 0 : index
      %c0_16 = arith.constant 0 : index
      %21 = vector.load %arg5[%c0_15, %c0_16] : memref<1x128xf32, #tpu.memory_space<vmem>>, vector<1x128xf32>
      %22 = vector.broadcast %21 : vector<1x128xf32> to vector<8x128xf32>
      %23 = arith.addf %20, %22 : vector<8x128xf32>
      %cst_17 = arith.constant 0.000000e+00 : f32
      %24 = vector.broadcast %cst_17 : f32 to vector<8x128xf32>
      %25 = arith.maximumf %23, %24 : vector<8x128xf32>
      %c0_18 = arith.constant 0 : index
      %c0_19 = arith.constant 0 : index
      %26 = vector.load %arg6[%c0_18, %c0_19] : memref<128x128xf32, #tpu.memory_space<vmem>>, vector<128x128xf32>
      %cst_20 = arith.constant dense<0.000000e+00> : vector<8x128xf32>
      %27 = tpu.matmul %25, %26, %cst_20 {dimension_numbers = #tpu.dot_dimension_numbers<[1], [0], [0], [1], [0, 0, 1, 1], [], []>} : vector<8x128xf32>, vector<128x128xf32>, vector<8x128xf32> -> vector<8x128xf32>
      %c0_21 = arith.constant 0 : index
      %c0_22 = arith.constant 0 : index
      %28 = vector.load %arg7[%c0_21, %c0_22] : memref<1x128xf32, #tpu.memory_space<vmem>>, vector<1x128xf32>
      %29 = vector.broadcast %28 : vector<1x128xf32> to vector<8x128xf32>
      %30 = arith.addf %27, %29 : vector<8x128xf32>
      %cst_23 = arith.constant 0.000000e+00 : f32
      %31 = vector.broadcast %cst_23 : f32 to vector<8x128xf32>
      %32 = arith.maximumf %30, %31 : vector<8x128xf32>
      %c0_24 = arith.constant 0 : index
      %c0_25 = arith.constant 0 : index
      %33 = vector.load %arg8[%c0_24, %c0_25] : memref<1x128xf32, #tpu.memory_space<vmem>>, vector<1x128xf32>
      %cst_26 = arith.constant dense<0.000000e+00> : vector<1x8xf32>
      %34 = tpu.matmul %33, %32, %cst_26 {dimension_numbers = #tpu.dot_dimension_numbers<[1], [1], [0], [0], [0, 0, 1, 0], [], []>} : vector<1x128xf32>, vector<8x128xf32>, vector<1x8xf32> -> vector<1x8xf32>
      %c0_27 = arith.constant 0 : index
      %c0_28 = arith.constant 0 : index
      %35 = memref.load %arg9[%c0_27, %c0_28] : memref<1x1xf32, #tpu.memory_space<smem>>
      %36 = vector.broadcast %35 : f32 to vector<1x8xf32>
      %37 = arith.addf %34, %36 : vector<1x8xf32>
      %cst_29 = arith.constant dense<0xFF800000> : vector<1xf32>
      %38 = vector.multi_reduction <maximumf>, %37, %cst_29 [1] : vector<1x8xf32> to vector<1xf32>
      %39 = vector.shape_cast %38 : vector<1xf32> to vector<1x1xf32>
      %40 = vector.broadcast %39 : vector<1x1xf32> to vector<1x8xf32>
      %41 = arith.subf %37, %40 : vector<1x8xf32>
      %42 = math.exp %41 : vector<1x8xf32>
      %cst_30 = arith.constant dense<0.000000e+00> : vector<1xf32>
      %43 = vector.multi_reduction <add>, %42, %cst_30 [1] : vector<1x8xf32> to vector<1xf32>
      %44 = vector.shape_cast %43 : vector<1xf32> to vector<1x1xf32>
      %45 = vector.broadcast %44 : vector<1x1xf32> to vector<1x8xf32>
      %46 = arith.divf %42, %45 : vector<1x8xf32>
      %c0_31 = arith.constant 0 : index
      %c0_32 = arith.constant 0 : index
      %47 = vector.load %arg10[%c0_31, %c0_32] : memref<1x8xf32, #tpu.memory_space<vmem>>, vector<1x8xf32>
      tpu.vector_store %arg10[%c0_31, %c0_32], %46 {strides = array<i32>} : memref<1x8xf32, #tpu.memory_space<vmem>>, vector<1x8xf32>,
    } else {
    }
    return
  }
  func.func @transform_0(%arg0: i32) -> (i32, i32, i32) {
    %c0_i32 = arith.constant 0 : i32
    %c0_i32_0 = arith.constant 0 : i32
    %c0_i32_1 = arith.constant 0 : i32
    return %c0_i32, %arg0, %c0_i32_0 : i32, i32, i32
  }
  func.func @transform_1(%arg0: i32) -> (i32, i32) {
    %c0_i32 = arith.constant 0 : i32
    %c0_i32_0 = arith.constant 0 : i32
    %c0_i32_1 = arith.constant 0 : i32
    return %c0_i32, %c0_i32_0 : i32, i32
  }
  func.func @transform_2(%arg0: i32) -> (i32, i32) {
    %c0_i32 = arith.constant 0 : i32
    %c0_i32_0 = arith.constant 0 : i32
    %c0_i32_1 = arith.constant 0 : i32
    return %c0_i32, %c0_i32_0 : i32, i32
  }
  func.func @transform_3(%arg0: i32) -> (i32, i32) {
    %c0_i32 = arith.constant 0 : i32
    %c0_i32_0 = arith.constant 0 : i32
    %c0_i32_1 = arith.constant 0 : i32
    return %c0_i32, %c0_i32_0 : i32, i32
  }
  func.func @transform_4(%arg0: i32) -> (i32, i32) {
    %c0_i32 = arith.constant 0 : i32
    %c0_i32_0 = arith.constant 0 : i32
    %c0_i32_1 = arith.constant 0 : i32
    return %c0_i32, %c0_i32_0 : i32, i32
  }
  func.func @transform_5(%arg0: i32) -> (i32, i32) {
    %c0_i32 = arith.constant 0 : i32
    %c0_i32_0 = arith.constant 0 : i32
    %c0_i32_1 = arith.constant 0 : i32
    return %c0_i32, %c0_i32_0 : i32, i32
  }
  func.func @transform_6(%arg0: i32) -> (i32, i32) {
    %c0_i32 = arith.constant 0 : i32
    %c0_i32_0 = arith.constant 0 : i32
    %c0_i32_1 = arith.constant 0 : i32
    return %c0_i32, %c0_i32_0 : i32, i32
  }
  func.func @transform_7(%arg0: i32) -> (i32, i32) {
    %c0_i32 = arith.constant 0 : i32
    %c0_i32_0 = arith.constant 0 : i32
    %c0_i32_1 = arith.constant 0 : i32
    return %c0_i32, %c0_i32_0 : i32, i32
  }
  func.func @transform_8(%arg0: i32) -> (i32, i32) {
    %c0_i32 = arith.constant 0 : i32
    %c0_i32_0 = arith.constant 0 : i32
    %c0_i32_1 = arith.constant 0 : i32
    return %c0_i32, %c0_i32_0 : i32, i32
  }
  func.func @transform_9(%arg0: i32) -> (i32, i32) {
    %c0_i32 = arith.constant 0 : i32
    %c0_i32_0 = arith.constant 0 : i32
    %c0_i32_1 = arith.constant 0 : i32
    return %c0_i32, %c0_i32_0 : i32, i32
  }
}

module attributes {stable_mosaic.version = 11 : i64} {
  func.func @eslm_kge_kernel(%arg0: i32, %arg1: memref<8x16x128xf32, #tpu.memory_space<vmem>>, %arg2: memref<8x128xf32, #tpu.memory_space<vmem>>, %arg3: memref<128x128xf32, #tpu.memory_space<vmem>>, %arg4: memref<128x128xf32, #tpu.memory_space<vmem>>, %arg5: memref<1x128xf32, #tpu.memory_space<vmem>>, %arg6: memref<128x128xf32, #tpu.memory_space<vmem>>, %arg7: memref<1x128xf32, #tpu.memory_space<vmem>>, %arg8: memref<1x128xf32, #tpu.memory_space<vmem>>, %arg9: memref<1x1xf32, #tpu.memory_space<smem>>, %arg10: memref<1x8xf32, #tpu.memory_space<vmem>>, %arg11: memref<8x128xf32, #tpu.memory_space<vmem>>) attributes {dimension_semantics = [#tpu.dimension_semantics<arbitrary>], iteration_bounds = array<i64: 2>, scalar_prefetch = 0 : i64, scratch_operands = 1 : i64, tpu.core_type = #tpu.core_type<tc>, window_params = [{transform_indices = @transform_0, window_bounds = array<i64: 8, 16, 128>}, {pipeline_mode = #tpu.pipeline_mode<synchronous>, transform_indices = @transform_1, window_bounds = array<i64: 8, 128>}, {pipeline_mode = #tpu.pipeline_mode<synchronous>, transform_indices = @transform_2, window_bounds = array<i64: 128, 128>}, {pipeline_mode = #tpu.pipeline_mode<synchronous>, transform_indices = @transform_3, window_bounds = array<i64: 128, 128>}, {pipeline_mode = #tpu.pipeline_mode<synchronous>, transform_indices = @transform_4, window_bounds = array<i64: 1, 128>}, {pipeline_mode = #tpu.pipeline_mode<synchronous>, transform_indices = @transform_5, window_bounds = array<i64: 128, 128>}, {pipeline_mode = #tpu.pipeline_mode<synchronous>, transform_indices = @transform_6, window_bounds = array<i64: 1, 128>}, {pipeline_mode = #tpu.pipeline_mode<synchronous>, transform_indices = @transform_7, window_bounds = array<i64: 1, 128>}, {transform_indices = @transform_8, window_bounds = array<i64: 1, 1>}, {pipeline_mode = #tpu.pipeline_mode<synchronous>, transform_indices = @transform_9, window_bounds = array<i64: 1, 8>}]} {
    %c0_i32 = arith.constant 0 : i32
    %0 = arith.cmpi eq, %arg0, %c0_i32 : i32
    %1 = arith.extui %0 : i1 to i32
    %c0_i32_0 = arith.constant 0 : i32
    %2 = arith.cmpi ne, %1, %c0_i32_0 : i32
    scf.if %2 {
      %cst = arith.constant 0.000000e+00 : f32
      %12 = vector.broadcast %cst : f32 to vector<8x128xf32>
      %c0 = arith.constant 0 : index
      %c0_6 = arith.constant 0 : index
      %13 = vector.load %arg11[%c0, %c0_6] : memref<8x128xf32, #tpu.memory_space<vmem>>, vector<8x128xf32>
      tpu.vector_store %arg11[%c0, %c0_6], %12 {strides = array<i32>} : memref<8x128xf32, #tpu.memory_space<vmem>>, vector<8x128xf32>,
    } else {
    }
    %c1_i32 = arith.constant 1 : i32
    %3 = arith.cmpi slt, %arg0, %c1_i32 : i32
    %4 = arith.extui %3 : i1 to i32
    %c0_i32_1 = arith.constant 0 : i32
    %5 = arith.cmpi ne, %4, %c0_i32_1 : i32
    scf.if %5 {
      %c0 = arith.constant 0 : index
      %c0_6 = arith.constant 0 : index
      %12 = vector.load %arg11[%c0, %c0_6] : memref<8x128xf32, #tpu.memory_space<vmem>>, vector<8x128xf32>
      %c0_7 = arith.constant 0 : index
      %c0_8 = arith.constant 0 : index
      %c0_9 = arith.constant 0 : index
      %13 = vector.load %arg1[%c0_7, %c0_8, %c0_9] : memref<8x16x128xf32, #tpu.memory_space<vmem>>, vector<8x16x128xf32>
      %cst = arith.constant dense<0.000000e+00> : vector<8x128xf32>
      %14 = vector.multi_reduction <add>, %13, %cst [1] : vector<8x16x128xf32> to vector<8x128xf32>
      %15 = arith.addf %12, %14 : vector<8x128xf32>
      %c0_10 = arith.constant 0 : index
      %c0_11 = arith.constant 0 : index
      %16 = vector.load %arg11[%c0_10, %c0_11] : memref<8x128xf32, #tpu.memory_space<vmem>>, vector<8x128xf32>
      tpu.vector_store %arg11[%c0_10, %c0_11], %15 {strides = array<i32>} : memref<8x128xf32, #tpu.memory_space<vmem>>, vector<8x128xf32>,
    } else {
    }
    %c1_i32_2 = arith.constant 1 : i32
    %6 = arith.cmpi eq, %arg0, %c1_i32_2 : i32
    %7 = arith.extui %6 : i1 to i32
    %c0_i32_3 = arith.constant 0 : i32
    %8 = arith.cmpi ne, %7, %c0_i32_3 : i32
    scf.if %8 {
      %c16_i32 = arith.constant 16 : i32
      %12 = arith.muli %arg0, %c16_i32 : i32
      %c24_i32 = arith.constant 24 : i32
      %13 = arith.subi %c24_i32, %12 : i32
      %14 = tpu.iota {dimensions = array<i32: 1>} : vector<8x16x128xi32>
      %15 = vector.broadcast %13 : i32 to vector<8x16x128xi32>
      %16 = arith.cmpi slt, %14, %15 : vector<8x16x128xi32>
      %c0 = arith.constant 0 : index
      %c0_6 = arith.constant 0 : index
      %c0_7 = arith.constant 0 : index
      %17 = vector.load %arg1[%c0, %c0_6, %c0_7] : memref<8x16x128xf32, #tpu.memory_space<vmem>>, vector<8x16x128xf32>
      %cst = arith.constant 0.000000e+00 : f32
      %18 = vector.broadcast %cst : f32 to vector<8x16x128xf32>
      %19 = arith.select %16, %17, %18 : vector<8x16x128xi1>, vector<8x16x128xf32>
      %c0_8 = arith.constant 0 : index
      %c0_9 = arith.constant 0 : index
      %20 = vector.load %arg11[%c0_8, %c0_9] : memref<8x128xf32, #tpu.memory_space<vmem>>, vector<8x128xf32>
      %cst_10 = arith.constant dense<0.000000e+00> : vector<8x128xf32>
      %21 = vector.multi_reduction <add>, %19, %cst_10 [1] : vector<8x16x128xf32> to vector<8x128xf32>
      %22 = arith.addf %20, %21 : vector<8x128xf32>
      %c0_11 = arith.constant 0 : index
      %c0_12 = arith.constant 0 : index
      %23 = vector.load %arg11[%c0_11, %c0_12] : memref<8x128xf32, #tpu.memory_space<vmem>>, vector<8x128xf32>
      tpu.vector_store %arg11[%c0_11, %c0_12], %22 {strides = array<i32>} : memref<8x128xf32, #tpu.memory_space<vmem>>, vector<8x128xf32>,
    } else {
    }
    %c1_i32_4 = arith.constant 1 : i32
    %9 = arith.cmpi eq, %arg0, %c1_i32_4 : i32
    %10 = arith.extui %9 : i1 to i32
    %c0_i32_5 = arith.constant 0 : i32
    %11 = arith.cmpi ne, %10, %c0_i32_5 : i32
    scf.if %11 {
      %c0 = arith.constant 0 : index
      %c0_6 = arith.constant 0 : index
      %12 = vector.load %arg11[%c0, %c0_6] : memref<8x128xf32, #tpu.memory_space<vmem>>, vector<8x128xf32>
      %cst = arith.constant 0.0416666679 : f32
      %13 = vector.broadcast %cst : f32 to vector<8x128xf32>
      %14 = arith.mulf %12, %13 : vector<8x128xf32>
      %c0_7 = arith.constant 0 : index
      %c0_8 = arith.constant 0 : index
      %15 = vector.load %arg2[%c0_7, %c0_8] : memref<8x128xf32, #tpu.memory_space<vmem>>, vector<8x128xf32>
      %c0_9 = arith.constant 0 : index
      %c0_10 = arith.constant 0 : index
      %16 = vector.load %arg3[%c0_9, %c0_10] : memref<128x128xf32, #tpu.memory_space<vmem>>, vector<128x128xf32>
      %cst_11 = arith.constant dense<0.000000e+00> : vector<8x128xf32>
      %17 = tpu.matmul %14, %16, %cst_11 {dimension_numbers = #tpu.dot_dimension_numbers<[1], [0], [0], [1], [0, 0, 1, 1], [], []>} : vector<8x128xf32>, vector<128x128xf32>, vector<8x128xf32> -> vector<8x128xf32>
      %c0_12 = arith.constant 0 : index
      %c0_13 = arith.constant 0 : index
      %18 = vector.load %arg4[%c0_12, %c0_13] : memref<128x128xf32, #tpu.memory_space<vmem>>, vector<128x128xf32>
      %cst_14 = arith.constant dense<0.000000e+00> : vector<8x128xf32>
      %19 = tpu.matmul %15, %18, %cst_14 {dimension_numbers = #tpu.dot_dimension_numbers<[1], [0], [0], [1], [0, 0, 1, 1], [], []>} : vector<8x128xf32>, vector<128x128xf32>, vector<8x128xf32> -> vector<8x128xf32>
      %20 = arith.addf %17, %19 : vector<8x128xf32>
      %c0_15 = arith.constant 0 : index
      %c0_16 = arith.constant 0 : index
      %21 = vector.load %arg5[%c0_15, %c0_16] : memref<1x128xf32, #tpu.memory_space<vmem>>, vector<1x128xf32>
      %22 = vector.broadcast %21 : vector<1x128xf32> to vector<8x128xf32>
      %23 = arith.addf %20, %22 : vector<8x128xf32>
      %cst_17 = arith.constant 0.000000e+00 : f32
      %24 = vector.broadcast %cst_17 : f32 to vector<8x128xf32>
      %25 = arith.maximumf %23, %24 : vector<8x128xf32>
      %c0_18 = arith.constant 0 : index
      %c0_19 = arith.constant 0 : index
      %26 = vector.load %arg6[%c0_18, %c0_19] : memref<128x128xf32, #tpu.memory_space<vmem>>, vector<128x128xf32>
      %cst_20 = arith.constant dense<0.000000e+00> : vector<8x128xf32>
      %27 = tpu.matmul %25, %26, %cst_20 {dimension_numbers = #tpu.dot_dimension_numbers<[1], [0], [0], [1], [0, 0, 1, 1], [], []>} : vector<8x128xf32>, vector<128x128xf32>, vector<8x128xf32> -> vector<8x128xf32>
      %c0_21 = arith.constant 0 : index
      %c0_22 = arith.constant 0 : index
      %28 = vector.load %arg7[%c0_21, %c0_22] : memref<1x128xf32, #tpu.memory_space<vmem>>, vector<1x128xf32>
      %29 = vector.broadcast %28 : vector<1x128xf32> to vector<8x128xf32>
      %30 = arith.addf %27, %29 : vector<8x128xf32>
      %cst_23 = arith.constant 0.000000e+00 : f32
      %31 = vector.broadcast %cst_23 : f32 to vector<8x128xf32>
      %32 = arith.maximumf %30, %31 : vector<8x128xf32>
      %c0_24 = arith.constant 0 : index
      %c0_25 = arith.constant 0 : index
      %33 = vector.load %arg8[%c0_24, %c0_25] : memref<1x128xf32, #tpu.memory_space<vmem>>, vector<1x128xf32>
      %cst_26 = arith.constant dense<0.000000e+00> : vector<1x8xf32>
      %34 = tpu.matmul %33, %32, %cst_26 {dimension_numbers = #tpu.dot_dimension_numbers<[1], [1], [0], [0], [0, 0, 1, 0], [], []>} : vector<1x128xf32>, vector<8x128xf32>, vector<1x8xf32> -> vector<1x8xf32>
      %c0_27 = arith.constant 0 : index
      %c0_28 = arith.constant 0 : index
      %35 = memref.load %arg9[%c0_27, %c0_28] : memref<1x1xf32, #tpu.memory_space<smem>>
      %36 = vector.broadcast %35 : f32 to vector<1x8xf32>
      %37 = arith.addf %34, %36 : vector<1x8xf32>
      %cst_29 = arith.constant dense<0xFF800000> : vector<1xf32>
      %38 = vector.multi_reduction <maximumf>, %37, %cst_29 [1] : vector<1x8xf32> to vector<1xf32>
      %39 = vector.shape_cast %38 : vector<1xf32> to vector<1x1xf32>
      %40 = vector.broadcast %39 : vector<1x1xf32> to vector<1x8xf32>
      %41 = arith.subf %37, %40 : vector<1x8xf32>
      %42 = math.exp %41 : vector<1x8xf32>
      %cst_30 = arith.constant dense<0.000000e+00> : vector<1xf32>
      %43 = vector.multi_reduction <add>, %42, %cst_30 [1] : vector<1x8xf32> to vector<1xf32>
      %44 = vector.shape_cast %43 : vector<1xf32> to vector<1x1xf32>
      %45 = vector.broadcast %44 : vector<1x1xf32> to vector<1x8xf32>
      %46 = arith.divf %42, %45 : vector<1x8xf32>
      %c0_31 = arith.constant 0 : index
      %c0_32 = arith.constant 0 : index
      %47 = vector.load %arg10[%c0_31, %c0_32] : memref<1x8xf32, #tpu.memory_space<vmem>>, vector<1x8xf32>
      tpu.vector_store %arg10[%c0_31, %c0_32], %46 {strides = array<i32>} : memref<1x8xf32, #tpu.memory_space<vmem>>, vector<1x8xf32>,
    } else {
    }
    return
  }
  func.func @transform_0(%arg0: i32) -> (i32, i32, i32) {
    %c0_i32 = arith.constant 0 : i32
    %c0_i32_0 = arith.constant 0 : i32
    %c0_i32_1 = arith.constant 0 : i32
    return %c0_i32, %arg0, %c0_i32_0 : i32, i32, i32
  }
  func.func @transform_1(%arg0: i32) -> (i32, i32) {
    %c0_i32 = arith.constant 0 : i32
    %c0_i32_0 = arith.constant 0 : i32
    %c0_i32_1 = arith.constant 0 : i32
    return %c0_i32, %c0_i32_0 : i32, i32
  }
  func.func @transform_2(%arg0: i32) -> (i32, i32) {
    %c0_i32 = arith.constant 0 : i32
    %c0_i32_0 = arith.constant 0 : i32
    %c0_i32_1 = arith.constant 0 : i32
    return %c0_i32, %c0_i32_0 : i32, i32
  }
  func.func @transform_3(%arg0: i32) -> (i32, i32) {
    %c0_i32 = arith.constant 0 : i32
    %c0_i32_0 = arith.constant 0 : i32
    %c0_i32_1 = arith.constant 0 : i32
    return %c0_i32, %c0_i32_0 : i32, i32
  }
  func.func @transform_4(%arg0: i32) -> (i32, i32) {
    %c0_i32 = arith.constant 0 : i32
    %c0_i32_0 = arith.constant 0 : i32
    %c0_i32_1 = arith.constant 0 : i32
    return %c0_i32, %c0_i32_0 : i32, i32
  }
  func.func @transform_5(%arg0: i32) -> (i32, i32) {
    %c0_i32 = arith.constant 0 : i32
    %c0_i32_0 = arith.constant 0 : i32
    %c0_i32_1 = arith.constant 0 : i32
    return %c0_i32, %c0_i32_0 : i32, i32
  }
  func.func @transform_6(%arg0: i32) -> (i32, i32) {
    %c0_i32 = arith.constant 0 : i32
    %c0_i32_0 = arith.constant 0 : i32
    %c0_i32_1 = arith.constant 0 : i32
    return %c0_i32, %c0_i32_0 : i32, i32
  }
  func.func @transform_7(%arg0: i32) -> (i32, i32) {
    %c0_i32 = arith.constant 0 : i32
    %c0_i32_0 = arith.constant 0 : i32
    %c0_i32_1 = arith.constant 0 : i32
    return %c0_i32, %c0_i32_0 : i32, i32
  }
  func.func @transform_8(%arg0: i32) -> (i32, i32) {
    %c0_i32 = arith.constant 0 : i32
    %c0_i32_0 = arith.constant 0 : i32
    %c0_i32_1 = arith.constant 0 : i32
    return %c0_i32, %c0_i32_0 : i32, i32
  }
  func.func @transform_9(%arg0: i32) -> (i32, i32) {
    %c0_i32 = arith.constant 0 : i32
    %c0_i32_0 = arith.constant 0 : i32
    %c0_i32_1 = arith.constant 0 : i32
    return %c0_i32, %c0_i32_0 : i32, i32
  }
}

</mosaic_0001>

<llo_original>
// kernel: tpu_custom_call.1
$region0: #{tpu_custom_call.1}
  #allocation0 [shape = 'u32[]', space=smem, size = 0x4, offset = 0x4, fixed_abs, tag = 'smem constant byte address 0x4 - core index']
  #allocation1 [shape = 'u32[72,128]{1,0:T(1,128)}', space=vmem, size = 0x9000, scoped, tag = 'internal scratch']
  #allocation2 [shape = 'f32[8,128]{1,0:T(8,128)}', space=vmem, size = 0x1000, scoped, tag = 'scratch operand']
  #allocation3 [shape = 'f32[1,1]{1,0:T(1,128)S(6)}', space=smem, size = 0x200, scoped, tag = 'scoped memory for tpu_custom_call.1']
  #allocation14 [shape = 's32[]', space=sflag, size = 0x4, offset = 0, fixed_abs, tag = 'sflag constant byte address 0x0 - dummy sync flag']
  %s0 = inlined_call_operand.hbm [shape: f32[8,24,128], index: 0, kind: input, shape index: {}]
  %s1 = inlined_call_operand.hbm [shape: f32[8,128], index: 1, kind: input, shape index: {}]
  %s2 = inlined_call_operand.hbm [shape: f32[128,128], index: 2, kind: input, shape index: {}]
  %s3 = inlined_call_operand.hbm [shape: f32[128,128], index: 3, kind: input, shape index: {}]
  %s4 = inlined_call_operand.vmem [shape: f32[1,128], index: 4, kind: input, shape index: {}]
  %s5 = inlined_call_operand.hbm [shape: f32[128,128], index: 5, kind: input, shape index: {}]
  %s6 = inlined_call_operand.vmem [shape: f32[1,128], index: 6, kind: input, shape index: {}]
  %s7 = inlined_call_operand.vmem [shape: f32[1,128], index: 7, kind: input, shape index: {}]
  %s8 = inlined_call_operand.<no memory space> [shape: f32[1,1], index: 8, kind: input, shape index: {}]
  %s9 = inlined_call_operand.hbm [shape: f32[1,8], index: 9, kind: output, shape index: {}]
  %s10 = sld [smem:[#allocation0]]
  $region101: #{tpu_custom_call.1} parent=0
    _
  %s12 = ssub.s32 1, %s10
  %s13 = scalar_select 0, %s12, %s10
  %14 = sst [smem:[#allocation3]] %s8
  $region1: #{tpu_custom_call.1} parent=0
    #allocation4 [shape = 'u8[131072]{0}', space=vmem, size = 0x20000, scoped, tag = 'input window, operand 0']
    #allocation5 [shape = 's32[2]{0}', space=sflag, size = 0x8, scoped, tag = 'scoped memory for tpu_custom_call.1']
    #allocation6 [shape = 's32[2]{0}', space=sflag, size = 0x8, scoped, tag = 'scoped memory for tpu_custom_call.1']
    #allocation7 [shape = 'u8[4096]{0}', space=vmem, size = 0x1000, scoped, tag = 'input window, operand 1, single buffered']
    #allocation8 [shape = 's32[1]{0}', space=sflag, size = 0x4, scoped, tag = 'scoped memory for tpu_custom_call.1']
    #allocation9 [shape = 'u8[65536]{0}', space=vmem, size = 0x10000, scoped, tag = 'input window, operand 2, single buffered']
    #allocation10 [shape = 'u8[65536]{0}', space=vmem, size = 0x10000, scoped, tag = 'input window, operand 3, single buffered']
    #allocation11 [shape = 's32[1]{0}', space=sflag, size = 0x4, scoped, tag = 'scoped memory for tpu_custom_call.1']
    #allocation12 [shape = 'u8[65536]{0}', space=vmem, size = 0x10000, scoped, tag = 'input window, operand 5, single buffered']
    #allocation13 [shape = 'u8[512]{0}', space=vmem, size = 0x400, scoped, tag = 'output window, operand 0, single buffered']
    %15 = vsyncpa [#allocation5], 0
    %s16 = scalar_lea.sflag [#allocation5], 1
    %17 = vsyncpa %s16, 0
    %18 = vsyncpa [#allocation8], 0
    %19 = vsyncpa [#allocation11], 0
    %20 = vsyncpa [#allocation6], 0
    loop: start=0, step=1, limit=4
    $region2: #{tpu_custom_call.1} parent=1 // loop_pre_header
      _
    $region3: #{tpu_custom_call.1} parent=1 // loop_header
      %s22 = sphi 0, %s26
      %p23 = scmp.ge.s32.totalorder %s22, 4
      %s32 = sphi 0, %s34
      %s35 = sphi 0, %s32
      %s36 = sphi 0, %s35
      %s52 = sphi 0, %s36
      %s56 = sphi 0, %s56
      %s58 = sphi 0, %s56
      %s59 = sphi 0, %s58
      %s73 = sphi 0, %s59
      %s77 = sphi 0, %s77
      %s79 = sphi 0, %s77
      %s80 = sphi 0, %s79
      %s94 = sphi 0, %s80
      %s98 = sphi 0, %s98
      %s100 = sphi 0, %s98
      %s101 = sphi 0, %s100
      %s115 = sphi 0, %s101
      %s119 = sphi 0, %s119
      %s121 = sphi 0, %s119
      %s122 = sphi 0, %s121
      %s136 = sphi 0, %s122
      %s140 = sphi 0, %s140
      %s142 = sphi 0, %s140
      %s143 = sphi 0, %s142
      %s157 = sphi 0, %s143
      %s161 = sphi 0, %s161
      %s163 = sphi 0, %s161
      %s164 = sphi 0, %s163
      %s178 = sphi 0, %s164
      %s182 = sphi 0, %s182
      %s184 = sphi 0, %s182
      %s185 = sphi 0, %s184
      %s199 = sphi 0, %s185
      %s203 = sphi 0, %s203
      %s205 = sphi 0, %s203
      %s206 = sphi 0, %s205
      %s220 = sphi 0, %s206
      %s224 = sphi 0, %s224
      %s226 = sphi 0, %s224
      %s227 = sphi 0, %s226
      %s241 = sphi 0, %s227
    $region4: #{tpu_custom_call.1} parent=1 // loop_header_branch
      %25 = sbr.rel (%p23) target = $region8
    $region5: #{tpu_custom_call.1} parent=1 // loop_body
      %s27 = ssub.s32 %s22, 1
      %s28 = ssub.s32 %s22, 2
      %s29 = sadd.s32 %s22, 1
      %s30 = ssub.s32 %s22, %s29
      %p31 = scmp.eq.s32.totalorder %s30, 0
      %s33 = sadd.s32 %s32, 1
      %s34 = scalar_select %p31, %s32, %s33
      %p37 = pneg %p31
      %p38 = scmp.eq.s32.totalorder %s22, 1
      %p39 = por %p37, %p38
      %p40 = scmp.ne.s32.totalorder %s32, %s35
      %p41 = scmp.eq.s32.totalorder %s22, 0
      %p42 = por %p40, %p41
      %p43 = scmp.ne.s32.totalorder %s32, %s35
      %p44 = scmp.eq.s32.totalorder %s27, 1
      %p45 = por %p43, %p44
      %p46 = scmp.ne.s32.totalorder %s35, %s36
      %p47 = scmp.eq.s32.totalorder %s27, 0
      %p48 = por %p46, %p47
      %p49 = scmp.ne.s32.totalorder %s35, %s36
      %p50 = scmp.eq.s32.totalorder %s28, 1
      %p51 = por %p49, %p50
      %p53 = scmp.ne.s32.totalorder %s36, %s52
      %p54 = scmp.eq.s32.totalorder %s28, 0
      %p55 = por %p53, %p54
      %s57 = sadd.s32 %s56, 1
      %p60 = scmp.eq.s32.totalorder %s22, 1
      %p61 = scmp.ne.s32.totalorder %s56, %s58
      %p62 = scmp.eq.s32.totalorder %s22, 0
      %p63 = por %p61, %p62
      %p64 = scmp.ne.s32.totalorder %s56, %s58
      %p65 = scmp.eq.s32.totalorder %s27, 1
      %p66 = por %p64, %p65
      %p67 = scmp.ne.s32.totalorder %s58, %s59
      %p68 = scmp.eq.s32.totalorder %s27, 0
      %p69 = por %p67, %p68
      %p70 = scmp.ne.s32.totalorder %s58, %s59
      %p71 = scmp.eq.s32.totalorder %s28, 1
      %p72 = por %p70, %p71
      %p74 = scmp.ne.s32.totalorder %s59, %s73
      %p75 = scmp.eq.s32.totalorder %s28, 0
      %p76 = por %p74, %p75
      %s78 = sadd.s32 %s77, 1
      %p81 = scmp.eq.s32.totalorder %s22, 1
      %p82 = scmp.ne.s32.totalorder %s77, %s79
      %p83 = scmp.eq.s32.totalorder %s22, 0
      %p84 = por %p82, %p83
      %p85 = scmp.ne.s32.totalorder %s77, %s79
      %p86 = scmp.eq.s32.totalorder %s27, 1
      %p87 = por %p85, %p86
      %p88 = scmp.ne.s32.totalorder %s79, %s80
      %p89 = scmp.eq.s32.totalorder %s27, 0
      %p90 = por %p88, %p89
      %p91 = scmp.ne.s32.totalorder %s79, %s80
      %p92 = scmp.eq.s32.totalorder %s28, 1
      %p93 = por %p91, %p92
      %p95 = scmp.ne.s32.totalorder %s80, %s94
      %p96 = scmp.eq.s32.totalorder %s28, 0
      %p97 = por %p95, %p96
      %s99 = sadd.s32 %s98, 1
      %p102 = scmp.eq.s32.totalorder %s22, 1
      %p103 = scmp.ne.s32.totalorder %s98, %s100
      %p104 = scmp.eq.s32.totalorder %s22, 0
      %p105 = por %p103, %p104
      %p106 = scmp.ne.s32.totalorder %s98, %s100
      %p107 = scmp.eq.s32.totalorder %s27, 1
      %p108 = por %p106, %p107
      %p109 = scmp.ne.s32.totalorder %s100, %s101
      %p110 = scmp.eq.s32.totalorder %s27, 0
      %p111 = por %p109, %p110
      %p112 = scmp.ne.s32.totalorder %s100, %s101
      %p113 = scmp.eq.s32.totalorder %s28, 1
      %p114 = por %p112, %p113
      %p116 = scmp.ne.s32.totalorder %s101, %s115
      %p117 = scmp.eq.s32.totalorder %s28, 0
      %p118 = por %p116, %p117
      %s120 = sadd.s32 %s119, 1
      %p123 = scmp.eq.s32.totalorder %s22, 1
      %p124 = scmp.ne.s32.totalorder %s119, %s121
      %p125 = scmp.eq.s32.totalorder %s22, 0
      %p126 = por %p124, %p125
      %p127 = scmp.ne.s32.totalorder %s119, %s121
      %p128 = scmp.eq.s32.totalorder %s27, 1
      %p129 = por %p127, %p128
      %p130 = scmp.ne.s32.totalorder %s121, %s122
      %p131 = scmp.eq.s32.totalorder %s27, 0
      %p132 = por %p130, %p131
      %p133 = scmp.ne.s32.totalorder %s121, %s122
      %p134 = scmp.eq.s32.totalorder %s28, 1
      %p135 = por %p133, %p134
      %p137 = scmp.ne.s32.totalorder %s122, %s136
      %p138 = scmp.eq.s32.totalorder %s28, 0
      %p139 = por %p137, %p138
      %s141 = sadd.s32 %s140, 1
      %p144 = scmp.eq.s32.totalorder %s22, 1
      %p145 = scmp.ne.s32.totalorder %s140, %s142
      %p146 = scmp.eq.s32.totalorder %s22, 0
      %p147 = por %p145, %p146
      %p148 = scmp.ne.s32.totalorder %s140, %s142
      %p149 = scmp.eq.s32.totalorder %s27, 1
      %p150 = por %p148, %p149
      %p151 = scmp.ne.s32.totalorder %s142, %s143
      %p152 = scmp.eq.s32.totalorder %s27, 0
      %p153 = por %p151, %p152
      %p154 = scmp.ne.s32.totalorder %s142, %s143
      %p155 = scmp.eq.s32.totalorder %s28, 1
      %p156 = por %p154, %p155
      %p158 = scmp.ne.s32.totalorder %s143, %s157
      %p159 = scmp.eq.s32.totalorder %s28, 0
      %p160 = por %p158, %p159
      %s162 = sadd.s32 %s161, 1
      %p165 = scmp.eq.s32.totalorder %s22, 1
      %p166 = scmp.ne.s32.totalorder %s161, %s163
      %p167 = scmp.eq.s32.totalorder %s22, 0
      %p168 = por %p166, %p167
      %p169 = scmp.ne.s32.totalorder %s161, %s163
      %p170 = scmp.eq.s32.totalorder %s27, 1
      %p171 = por %p169, %p170
      %p172 = scmp.ne.s32.totalorder %s163, %s164
      %p173 = scmp.eq.s32.totalorder %s27, 0
      %p174 = por %p172, %p173
      %p175 = scmp.ne.s32.totalorder %s163, %s164
      %p176 = scmp.eq.s32.totalorder %s28, 1
      %p177 = por %p175, %p176
      %p179 = scmp.ne.s32.totalorder %s164, %s178
      %p180 = scmp.eq.s32.totalorder %s28, 0
      %p181 = por %p179, %p180
      %s183 = sadd.s32 %s182, 1
      %p186 = scmp.eq.s32.totalorder %s22, 1
      %p187 = scmp.ne.s32.totalorder %s182, %s184
      %p188 = scmp.eq.s32.totalorder %s22, 0
      %p189 = por %p187, %p188
      %p190 = scmp.ne.s32.totalorder %s182, %s184
      %p191 = scmp.eq.s32.totalorder %s27, 1
      %p192 = por %p190, %p191
      %p193 = scmp.ne.s32.totalorder %s184, %s185
      %p194 = scmp.eq.s32.totalorder %s27, 0
      %p195 = por %p193, %p194
      %p196 = scmp.ne.s32.totalorder %s184, %s185
      %p197 = scmp.eq.s32.totalorder %s28, 1
      %p198 = por %p196, %p197
      %p200 = scmp.ne.s32.totalorder %s185, %s199
      %p201 = scmp.eq.s32.totalorder %s28, 0
      %p202 = por %p200, %p201
      %s204 = sadd.s32 %s203, 1
      %p207 = scmp.eq.s32.totalorder %s22, 1
      %p208 = scmp.ne.s32.totalorder %s203, %s205
      %p209 = scmp.eq.s32.totalorder %s22, 0
      %p210 = por %p208, %p209
      %p211 = scmp.ne.s32.totalorder %s203, %s205
      %p212 = scmp.eq.s32.totalorder %s27, 1
      %p213 = por %p211, %p212
      %p214 = scmp.ne.s32.totalorder %s205, %s206
      %p215 = scmp.eq.s32.totalorder %s27, 0
      %p216 = por %p214, %p215
      %p217 = scmp.ne.s32.totalorder %s205, %s206
      %p218 = scmp.eq.s32.totalorder %s28, 1
      %p219 = por %p217, %p218
      %p221 = scmp.ne.s32.totalorder %s206, %s220
      %p222 = scmp.eq.s32.totalorder %s28, 0
      %p223 = por %p221, %p222
      %s225 = sadd.s32 %s224, 1
      %p228 = scmp.eq.s32.totalorder %s22, 1
      %p229 = scmp.ne.s32.totalorder %s224, %s226
      %p230 = scmp.eq.s32.totalorder %s22, 0
      %p231 = por %p229, %p230
      %p232 = scmp.ne.s32.totalorder %s224, %s226
      %p233 = scmp.eq.s32.totalorder %s27, 1
      %p234 = por %p232, %p233
      %p235 = scmp.ne.s32.totalorder %s226, %s227
      %p236 = scmp.eq.s32.totalorder %s27, 0
      %p237 = por %p235, %p236
      %p238 = scmp.ne.s32.totalorder %s226, %s227
      %p239 = scmp.eq.s32.totalorder %s28, 1
      %p240 = por %p238, %p239
      %p242 = scmp.ne.s32.totalorder %s227, %s241
      %p243 = scmp.eq.s32.totalorder %s28, 0
      %p244 = por %p242, %p243
      %p245 = scmp.le.s32.totalorder 1, %s22
      %p246 = scmp.lt.s32.totalorder %s22, 3
      %p247 = pnand %p245, %p246
      %p248 = pneg %p247
      // Predicated region
      $region9: #{tpu_custom_call.1} parent=5 // pred_check
        _
      $region10: #{tpu_custom_call.1} parent=5 // pred_check_branch
        %250 = sbr.rel (%p247) target = $region12
      $region11: #{tpu_custom_call.1} parent=5 // pred_region
        %s251 = ssub.s32 %s22, 1
        // Predicated region
        $region13: #{tpu_custom_call.1} parent=11 // pred_check
          %p252 = pneg %p69
        $region14: #{tpu_custom_call.1} parent=11 // pred_check_branch
          %254 = sbr.rel (%p252) target = $region16
        $region15: #{tpu_custom_call.1} parent=11 // pred_region
          %256 = vsyncadd [#allocation8], 0
          %s258 = sshll.u32 %s1, 4
          %s259 = int_to_ptr.hbm [resolvable:$true] %s258
          %s260 = sshll.u32 [#allocation7], 4
          %s261 = int_to_ptr.vmem [resolvable:$true] %s260
          %263 = dma.hbm_to_vmem [thread:$0]  %s259, 128, %s261, [#allocation8]
        $region16: #{tpu_custom_call.1} parent=11 // pred_fallthru
          _
        // Predicated region
        $region17: #{tpu_custom_call.1} parent=11 // pred_check
          %p264 = pneg %p90
        $region18: #{tpu_custom_call.1} parent=11 // pred_check_branch
          %266 = sbr.rel (%p264) target = $region20
        $region19: #{tpu_custom_call.1} parent=11 // pred_region
          %268 = vsyncadd [#allocation8], 0
          %s269 = sshll.u32 %s2, 4
          %s270 = int_to_ptr.hbm [resolvable:$true] %s269
          %s271 = sshll.u32 [#allocation9], 4
          %s272 = int_to_ptr.vmem [resolvable:$true] %s271
          %277 = dma.hbm_to_vmem [thread:$0]  %s270, 2048, %s272, [#allocation8], 128, 128, 8
        $region20: #{tpu_custom_call.1} parent=11 // pred_fallthru
          _
        // Predicated region
        $region21: #{tpu_custom_call.1} parent=11 // pred_check
          %p278 = pneg %p111
        $region22: #{tpu_custom_call.1} parent=11 // pred_check_branch
          %280 = sbr.rel (%p278) target = $region24
        $region23: #{tpu_custom_call.1} parent=11 // pred_region
          %282 = vsyncadd [#allocation11], 0
          %s283 = sshll.u32 %s3, 4
          %s284 = int_to_ptr.hbm [resolvable:$true] %s283
          %s285 = sshll.u32 [#allocation10], 4
          %s286 = int_to_ptr.vmem [resolvable:$true] %s285
          %291 = dma.hbm_to_vmem [thread:$0]  %s284, 2048, %s286, [#allocation11], 128, 128, 8
        $region24: #{tpu_custom_call.1} parent=11 // pred_fallthru
          _
        // Predicated region
        $region25: #{tpu_custom_call.1} parent=11 // pred_check
          %p292 = pneg %p132
        $region26: #{tpu_custom_call.1} parent=11 // pred_check_branch
          %294 = sbr.rel (%p292) target = $region28
        $region27: #{tpu_custom_call.1} parent=11 // pred_region
          _
        $region28: #{tpu_custom_call.1} parent=11 // pred_fallthru
          _
        // Predicated region
        $region29: #{tpu_custom_call.1} parent=11 // pred_check
          %p295 = pneg %p153
        $region30: #{tpu_custom_call.1} parent=11 // pred_check_branch
          %297 = sbr.rel (%p295) target = $region32
        $region31: #{tpu_custom_call.1} parent=11 // pred_region
          %299 = vsyncadd [#allocation11], 0
          %s300 = sshll.u32 %s5, 4
          %s301 = int_to_ptr.hbm [resolvable:$true] %s300
          %s302 = sshll.u32 [#allocation12], 4
          %s303 = int_to_ptr.vmem [resolvable:$true] %s302
          %308 = dma.hbm_to_vmem [thread:$0]  %s301, 2048, %s303, [#allocation11], 128, 128, 8
        $region32: #{tpu_custom_call.1} parent=11 // pred_fallthru
          _
        // Predicated region
        $region33: #{tpu_custom_call.1} parent=11 // pred_check
          %p309 = pneg %p174
        $region34: #{tpu_custom_call.1} parent=11 // pred_check_branch
          %311 = sbr.rel (%p309) target = $region36
        $region35: #{tpu_custom_call.1} parent=11 // pred_region
          _
        $region36: #{tpu_custom_call.1} parent=11 // pred_fallthru
          _
        // Predicated region
        $region37: #{tpu_custom_call.1} parent=11 // pred_check
          %p312 = pneg %p195
        $region38: #{tpu_custom_call.1} parent=11 // pred_check_branch
          %314 = sbr.rel (%p312) target = $region40
        $region39: #{tpu_custom_call.1} parent=11 // pred_region
          _
        $region40: #{tpu_custom_call.1} parent=11 // pred_fallthru
          _
        // Predicated region
        $region41: #{tpu_custom_call.1} parent=11 // pred_check
          %p315 = pneg %p216
        $region42: #{tpu_custom_call.1} parent=11 // pred_check_branch
          %317 = sbr.rel (%p315) target = $region44
        $region43: #{tpu_custom_call.1} parent=11 // pred_region
          _
        $region44: #{tpu_custom_call.1} parent=11 // pred_fallthru
          _
      $region12: #{tpu_custom_call.1} parent=5 // pred_fallthru
        _
      %p318 = scmp.lt.s32.totalorder %s22, 2
      // Predicated region
      $region45: #{tpu_custom_call.1} parent=5 // pred_check
        %p319 = pneg %p318
      $region46: #{tpu_custom_call.1} parent=5 // pred_check_branch
        %321 = sbr.rel (%p319) target = $region48
      $region47: #{tpu_custom_call.1} parent=5 // pred_region
        // Predicated region
        $region49: #{tpu_custom_call.1} parent=47 // pred_check
          %p322 = pneg %p42
        $region50: #{tpu_custom_call.1} parent=47 // pred_check_branch
          %324 = sbr.rel (%p322) target = $region52
        $region51: #{tpu_custom_call.1} parent=47 // pred_region
          #allocation15 [shape = 'u32[6]{0}', space=smem, size = 0x18, scoped, tag = 'DMA stride descriptor']
          %s325 = sand.u32 %s32, 1
          %s326 = scalar_lea.sflag [#allocation5], %s325
          %s327 = sand.u32 %s32, 1
          %s328 = smul.addr %s327, 128
          %s329 = scalar_lea.vmem [#allocation4], %s328
          %s330 = smul.u32 2, %s22
          %s331 = ssub.s32 3, %s330
          %p332 = scmp.lt.s32.totalorder %s331, 2
          %s333 = scalar_select %p332, %s331, 2
          %s334 = smul.u32 64, %s333
          %s335 = ssub.s32 128, %s334
          %s336 = sshll.u32 %s335, 4
          %337 = vsyncadd %s326, %s336
          %p338 = scmp.ne.s32.totalorder 0, %s334
          %s339 = smul.addr %s330, 8
          %s340 = scalar_lea.hbm %s0, %s339
          %s341 = smul.u32 8, %s333
          %s342 = smul.u32 %s341, 8
          %s344 = sshll.u32 1, 14
          %s345 = sxor.u32 4294967295, %s344
          %s347 = sld [smem:[#allocation0]]
          %s348 = sadd.s32 2, %s347
          %s350 = sshll.u32 7, 26
          %s351 = sxor.u32 4294967295, %s350
          %s352 = sand.u32 0, %s351
          %s353 = sshll.u32 %s348, 26
          %s354 = sor.u32 %s352, %s353
          %s355 = sshll.u32 %s340, 4
          %s356 = int_to_ptr.hbm [resolvable:$true] %s355
          %s357 = sshll.u32 %s329, 4
          %s358 = int_to_ptr.vmem [resolvable:$true] %s357
          %s359 = sshll.u32 %s342, 4
          %364 = sst [smem:[#allocation15]] 384
          %s365 = scalar_lea.smem [#allocation15], 1
          %366 = sst [smem:[%s365]] 256
          %s367 = scalar_lea.smem [#allocation15], 2
          %368 = sst [smem:[%s367]] %s333
          %s369 = scalar_lea.smem [#allocation15], 3
          %370 = sst [smem:[%s369]] 128
          %s371 = scalar_lea.smem [#allocation15], 4
          %372 = sst [smem:[%s371]] 128
          %s373 = scalar_lea.smem [#allocation15], 5
          %374 = sst [smem:[%s373]] 8
          %376 = dma.general (%p338), %s356, %s359, %s358, %s326, [#allocation14], [#allocation15], %s354, 0
        $region52: #{tpu_custom_call.1} parent=47 // pred_fallthru
          _
      $region48: #{tpu_custom_call.1} parent=5 // pred_fallthru
        _
      %p377 = scmp.le.s32.totalorder 1, %s22
      %p378 = scmp.lt.s32.totalorder %s22, 3
      %p379 = pnand %p377, %p378
      %p380 = pneg %p379
      // Predicated region
      $region53: #{tpu_custom_call.1} parent=5 // pred_check
        _
      $region54: #{tpu_custom_call.1} parent=5 // pred_check_branch
        %382 = sbr.rel (%p379) target = $region56
      $region55: #{tpu_custom_call.1} parent=5 // pred_region
        %s383 = ssub.s32 %s22, 1
        %s384 = sand.u32 %s35, 1
        %s385 = scalar_lea.sflag [#allocation5], %s384
        %s386 = sand.u32 %s35, 1
        %s387 = smul.addr %s386, 128
        %s388 = scalar_lea.vmem [#allocation4], %s387
        // Predicated region
        $region57: #{tpu_custom_call.1} parent=55 // pred_check
          %p389 = pneg %p48
        $region58: #{tpu_custom_call.1} parent=55 // pred_check_branch
          %391 = sbr.rel (%p389) target = $region60
        $region59: #{tpu_custom_call.1} parent=55 // pred_region
          %393 = dma.done %s385, 2048
        $region60: #{tpu_custom_call.1} parent=55 // pred_fallthru
          _
        // Predicated region
        $region61: #{tpu_custom_call.1} parent=55 // pred_check
          %p394 = pneg %p69
        $region62: #{tpu_custom_call.1} parent=55 // pred_check_branch
          %396 = sbr.rel (%p394) target = $region64
        $region63: #{tpu_custom_call.1} parent=55 // pred_region
          %398 = dma.done [#allocation8], 128
        $region64: #{tpu_custom_call.1} parent=55 // pred_fallthru
          _
        // Predicated region
        $region65: #{tpu_custom_call.1} parent=55 // pred_check
          %p399 = pneg %p90
        $region66: #{tpu_custom_call.1} parent=55 // pred_check_branch
          %401 = sbr.rel (%p399) target = $region68
        $region67: #{tpu_custom_call.1} parent=55 // pred_region
          %403 = dma.done [#allocation8], 2048
        $region68: #{tpu_custom_call.1} parent=55 // pred_fallthru
          _
        // Predicated region
        $region69: #{tpu_custom_call.1} parent=55 // pred_check
          %p404 = pneg %p111
        $region70: #{tpu_custom_call.1} parent=55 // pred_check_branch
          %406 = sbr.rel (%p404) target = $region72
        $region71: #{tpu_custom_call.1} parent=55 // pred_region
          %408 = dma.done [#allocation11], 2048
        $region72: #{tpu_custom_call.1} parent=55 // pred_fallthru
          _
        // Predicated region
        $region73: #{tpu_custom_call.1} parent=55 // pred_check
          %p409 = pneg %p153
        $region74: #{tpu_custom_call.1} parent=55 // pred_check_branch
          %411 = sbr.rel (%p409) target = $region76
        $region75: #{tpu_custom_call.1} parent=55 // pred_region
          %413 = dma.done [#allocation11], 2048
        $region76: #{tpu_custom_call.1} parent=55 // pred_fallthru
          _
        %s414 = sand.u32 %s35, 1
        %s415 = scalar_lea.sflag [#allocation5], %s414
        %s416 = sand.u32 %s35, 1
        %s417 = smul.addr %s416, 128
        %s418 = scalar_lea.vmem [#allocation4], %s417
        %p419 = pneg %p48
        %p420 = pneg %p45
        %p421 = pneg %p69
        %p422 = pneg %p66
        %p423 = pneg %p90
        %p424 = pneg %p87
        %p425 = pneg %p111
        %p426 = pneg %p108
        %p427 = pneg %p132
        %p428 = pneg %p129
        %p429 = pneg %p153
        %p430 = pneg %p150
        %p431 = pneg %p174
        %p432 = pneg %p171
        %p433 = pneg %p195
        %p434 = pneg %p192
        %p435 = pneg %p216
        %p436 = pneg %p213
        %p437 = pneg %p237
        %p438 = pneg %p234
        %s439 = smul.u32 2, %s27
        %s440 = ssub.s32 3, %s439
        %p441 = scmp.lt.s32.totalorder %s440, 2
        %s442 = scalar_select %p441, %s440, 2
        %s443 = smul.u32 64, %s442
        %p444 = scmp.eq.s32.totalorder %s27, 0
        // Predicated region
        $region77: #{tpu_custom_call.1} parent=55 // pred_check
          %p445 = pneg %p444
        $region78: #{tpu_custom_call.1} parent=55 // pred_check_branch
          %447 = sbr.rel (%p445) target = $region80
        $region79: #{tpu_custom_call.1} parent=55 // pred_region
          %448 = vst [vmem:[#allocation2] sm:$0xff] 0.0
        $region80: #{tpu_custom_call.1} parent=55 // pred_fallthru
          _
        %p449 = scmp.lt.s32.totalorder %s27, 1
        // Predicated region
        $region81: #{tpu_custom_call.1} parent=55 // pred_check
          %p450 = pneg %p449
        $region82: #{tpu_custom_call.1} parent=55 // pred_check_branch
          %452 = sbr.rel (%p450) target = $region84
        $region83: #{tpu_custom_call.1} parent=55 // pred_region
          %v453 = vld [vmem:[#allocation2] sm:$0xff]
          %v454 = vld [vmem:[%s388] sm:$0xff]
          %v455 = vld [vmem:[%s388 + $0x8] sm:$0xff]
          %v456 = vld [vmem:[%s388 + $0x10] sm:$0xff]
          %v457 = vld [vmem:[%s388 + $0x18] sm:$0xff]
          %v458 = vld [vmem:[%s388 + $0x20] sm:$0xff]
          %v459 = vld [vmem:[%s388 + $0x28] sm:$0xff]
          %v460 = vld [vmem:[%s388 + $0x30] sm:$0xff]
          %v461 = vld [vmem:[%s388 + $0x38] sm:$0xff]
          %v462 = vld [vmem:[%s388 + $0x40] sm:$0xff]
          %v463 = vld [vmem:[%s388 + $0x48] sm:$0xff]
          %v464 = vld [vmem:[%s388 + $0x50] sm:$0xff]
          %v465 = vld [vmem:[%s388 + $0x58] sm:$0xff]
          %v466 = vld [vmem:[%s388 + $0x60] sm:$0xff]
          %v467 = vld [vmem:[%s388 + $0x68] sm:$0xff]
          %v468 = vld [vmem:[%s388 + $0x70] sm:$0xff]
          %v469 = vld [vmem:[%s388 + $0x78] sm:$0xff]
          %v470 = vadd.f32 %v454, %v455
          %v471 = vrot.slane %v470, 4
          %v472 = vadd.f32 %v470, %v471
          %v473 = vrot.slane %v472, 2
          %v474 = vadd.f32 %v472, %v473
          %v475 = vrot.slane %v474, 1
          %v476 = vadd.f32 %v474, %v475
          %v477 = vadd.f32 %v456, %v457
          %v478 = vrot.slane %v477, 4
          %v479 = vadd.f32 %v477, %v478
          %v480 = vrot.slane %v479, 2
          %v481 = vadd.f32 %v479, %v480
          %v482 = vrot.slane %v481, 1
          %v483 = vadd.f32 %v481, %v482
          %v484 = vadd.f32 %v458, %v459
          %v485 = vrot.slane %v484, 4
          %v486 = vadd.f32 %v484, %v485
          %v487 = vrot.slane %v486, 2
          %v488 = vadd.f32 %v486, %v487
          %v489 = vrot.slane %v488, 1
          %v490 = vadd.f32 %v488, %v489
          %v491 = vadd.f32 %v460, %v461
          %v492 = vrot.slane %v491, 4
          %v493 = vadd.f32 %v491, %v492
          %v494 = vrot.slane %v493, 2
          %v495 = vadd.f32 %v493, %v494
          %v496 = vrot.slane %v495, 1
          %v497 = vadd.f32 %v495, %v496
          %v498 = vadd.f32 %v462, %v463
          %v499 = vrot.slane %v498, 4
          %v500 = vadd.f32 %v498, %v499
          %v501 = vrot.slane %v500, 2
          %v502 = vadd.f32 %v500, %v501
          %v503 = vrot.slane %v502, 1
          %v504 = vadd.f32 %v502, %v503
          %v505 = vadd.f32 %v464, %v465
          %v506 = vrot.slane %v505, 4
          %v507 = vadd.f32 %v505, %v506
          %v508 = vrot.slane %v507, 2
          %v509 = vadd.f32 %v507, %v508
          %v510 = vrot.slane %v509, 1
          %v511 = vadd.f32 %v509, %v510
          %v512 = vadd.f32 %v466, %v467
          %v513 = vrot.slane %v512, 4
          %v514 = vadd.f32 %v512, %v513
          %v515 = vrot.slane %v514, 2
          %v516 = vadd.f32 %v514, %v515
          %v517 = vrot.slane %v516, 1
          %v518 = vadd.f32 %v516, %v517
          %v519 = vadd.f32 %v468, %v469
          %v520 = vrot.slane %v519, 4
          %v521 = vadd.f32 %v519, %v520
          %v522 = vrot.slane %v521, 2
          %v523 = vadd.f32 %v521, %v522
          %v524 = vrot.slane %v523, 1
          %v525 = vadd.f32 %v523, %v524
          %vm534 = vcmask 1041409
          %v535 = vsel %vm534, %v483, %v476
          %vm536 = vcmask 1042434
          %v537 = vsel %vm536, %v490, %v535
          %vm538 = vcmask 1043459
          %v539 = vsel %vm538, %v497, %v537
          %vm540 = vcmask 1044484
          %v541 = vsel %vm540, %v504, %v539
          %vm542 = vcmask 1045509
          %v543 = vsel %vm542, %v511, %v541
          %vm544 = vcmask 1046534
          %v545 = vsel %vm544, %v518, %v543
          %vm546 = vcmask 1047559
          %v547 = vsel %vm546, %v525, %v545
          %v549 = vadd.f32 %v453, %v547
          %550 = vst [vmem:[#allocation2] sm:$0xff] %v549
        $region84: #{tpu_custom_call.1} parent=55 // pred_fallthru
          _
        %p551 = scmp.eq.s32.totalorder %s27, 1
        // Predicated region
        $region85: #{tpu_custom_call.1} parent=55 // pred_check
          %p552 = pneg %p551
        $region86: #{tpu_custom_call.1} parent=55 // pred_check_branch
          %554 = sbr.rel (%p552) target = $region88
        $region87: #{tpu_custom_call.1} parent=55 // pred_region
          %s555 = smul.u32 %s27, 16
          %s556 = ssub.s32 24, %s555
          %v557 = vlaneseq
          %v558 = vshrl.u32 %v557, 7
          %v559 = vadd.s32 %v558, 8
          %v560 = vstv %s556
          %vm561 = vcmp.lt.s32.totalorder %v558, %v560
          %vm562 = vcmp.lt.s32.totalorder %v559, %v560
          %v563 = vld [vmem:[%s388] sm:$0xff]
          %v564 = vld [vmem:[%s388 + $0x8] sm:$0xff]
          %v565 = vld [vmem:[%s388 + $0x10] sm:$0xff]
          %v566 = vld [vmem:[%s388 + $0x18] sm:$0xff]
          %v567 = vld [vmem:[%s388 + $0x20] sm:$0xff]
          %v568 = vld [vmem:[%s388 + $0x28] sm:$0xff]
          %v569 = vld [vmem:[%s388 + $0x30] sm:$0xff]
          %v570 = vld [vmem:[%s388 + $0x38] sm:$0xff]
          %v571 = vld [vmem:[%s388 + $0x40] sm:$0xff]
          %v572 = vld [vmem:[%s388 + $0x48] sm:$0xff]
          %v573 = vld [vmem:[%s388 + $0x50] sm:$0xff]
          %v574 = vld [vmem:[%s388 + $0x58] sm:$0xff]
          %v575 = vld [vmem:[%s388 + $0x60] sm:$0xff]
          %v576 = vld [vmem:[%s388 + $0x68] sm:$0xff]
          %v577 = vld [vmem:[%s388 + $0x70] sm:$0xff]
          %v578 = vld [vmem:[%s388 + $0x78] sm:$0xff]
          %v579 = vsel %vm561, %v563, 0.0
          %v580 = vsel %vm562, %v564, 0.0
          %v581 = vsel %vm561, %v565, 0.0
          %v582 = vsel %vm562, %v566, 0.0
          %v583 = vsel %vm561, %v567, 0.0
          %v584 = vsel %vm562, %v568, 0.0
          %v585 = vsel %vm561, %v569, 0.0
          %v586 = vsel %vm562, %v570, 0.0
          %v587 = vsel %vm561, %v571, 0.0
          %v588 = vsel %vm562, %v572, 0.0
          %v589 = vsel %vm561, %v573, 0.0
          %v590 = vsel %vm562, %v574, 0.0
          %v591 = vsel %vm561, %v575, 0.0
          %v592 = vsel %vm562, %v576, 0.0
          %v593 = vsel %vm561, %v577, 0.0
          %v594 = vsel %vm562, %v578, 0.0
          %v595 = vld [vmem:[#allocation2] sm:$0xff]
          %v596 = vadd.f32 %v579, %v580
          %v597 = vrot.slane %v596, 4
          %v598 = vadd.f32 %v596, %v597
          %v599 = vrot.slane %v598, 2
          %v600 = vadd.f32 %v598, %v599
          %v601 = vrot.slane %v600, 1
          %v602 = vadd.f32 %v600, %v601
          %v603 = vadd.f32 %v581, %v582
          %v604 = vrot.slane %v603, 4
          %v605 = vadd.f32 %v603, %v604
          %v606 = vrot.slane %v605, 2
          %v607 = vadd.f32 %v605, %v606
          %v608 = vrot.slane %v607, 1
          %v609 = vadd.f32 %v607, %v608
          %v610 = vadd.f32 %v583, %v584
          %v611 = vrot.slane %v610, 4
          %v612 = vadd.f32 %v610, %v611
          %v613 = vrot.slane %v612, 2
          %v614 = vadd.f32 %v612, %v613
          %v615 = vrot.slane %v614, 1
          %v616 = vadd.f32 %v614, %v615
          %v617 = vadd.f32 %v585, %v586
          %v618 = vrot.slane %v617, 4
          %v619 = vadd.f32 %v617, %v618
          %v620 = vrot.slane %v619, 2
          %v621 = vadd.f32 %v619, %v620
          %v622 = vrot.slane %v621, 1
          %v623 = vadd.f32 %v621, %v622
          %v624 = vadd.f32 %v587, %v588
          %v625 = vrot.slane %v624, 4
          %v626 = vadd.f32 %v624, %v625
          %v627 = vrot.slane %v626, 2
          %v628 = vadd.f32 %v626, %v627
          %v629 = vrot.slane %v628, 1
          %v630 = vadd.f32 %v628, %v629
          %v631 = vadd.f32 %v589, %v590
          %v632 = vrot.slane %v631, 4
          %v633 = vadd.f32 %v631, %v632
          %v634 = vrot.slane %v633, 2
          %v635 = vadd.f32 %v633, %v634
          %v636 = vrot.slane %v635, 1
          %v637 = vadd.f32 %v635, %v636
          %v638 = vadd.f32 %v591, %v592
          %v639 = vrot.slane %v638, 4
          %v640 = vadd.f32 %v638, %v639
          %v641 = vrot.slane %v640, 2
          %v642 = vadd.f32 %v640, %v641
          %v643 = vrot.slane %v642, 1
          %v644 = vadd.f32 %v642, %v643
          %v645 = vadd.f32 %v593, %v594
          %v646 = vrot.slane %v645, 4
          %v647 = vadd.f32 %v645, %v646
          %v648 = vrot.slane %v647, 2
          %v649 = vadd.f32 %v647, %v648
          %v650 = vrot.slane %v649, 1
          %v651 = vadd.f32 %v649, %v650
          %vm660 = vcmask 1041409
          %v661 = vsel %vm660, %v609, %v602
          %vm662 = vcmask 1042434
          %v663 = vsel %vm662, %v616, %v661
          %vm664 = vcmask 1043459
          %v665 = vsel %vm664, %v623, %v663
          %vm666 = vcmask 1044484
          %v667 = vsel %vm666, %v630, %v665
          %vm668 = vcmask 1045509
          %v669 = vsel %vm668, %v637, %v667
          %vm670 = vcmask 1046534
          %v671 = vsel %vm670, %v644, %v669
          %vm672 = vcmask 1047559
          %v673 = vsel %vm672, %v651, %v671
          %v675 = vadd.f32 %v595, %v673
          %676 = vst [vmem:[#allocation2] sm:$0xff] %v675
          %v677 = vld [vmem:[#allocation2] sm:$0xff]
          %v678 = vmul.f32 %v677, 0.041666668
          %v679 = vld [vmem:[#allocation7] sm:$0xff]
          %v680 = vld [vmem:[#allocation9] sm:$0xff]
          %v681 = vld [vmem:[#allocation9 + $0x8] sm:$0xff]
          %v682 = vld [vmem:[#allocation9 + $0x10] sm:$0xff]
          %v683 = vld [vmem:[#allocation9 + $0x18] sm:$0xff]
          %v684 = vld [vmem:[#allocation9 + $0x20] sm:$0xff]
          %v685 = vld [vmem:[#allocation9 + $0x28] sm:$0xff]
          %v686 = vld [vmem:[#allocation9 + $0x30] sm:$0xff]
          %v687 = vld [vmem:[#allocation9 + $0x38] sm:$0xff]
          %v688 = vld [vmem:[#allocation9 + $0x40] sm:$0xff]
          %v689 = vld [vmem:[#allocation9 + $0x48] sm:$0xff]
          %v690 = vld [vmem:[#allocation9 + $0x50] sm:$0xff]
          %v691 = vld [vmem:[#allocation9 + $0x58] sm:$0xff]
          %v692 = vld [vmem:[#allocation9 + $0x60] sm:$0xff]
          %v693 = vld [vmem:[#allocation9 + $0x68] sm:$0xff]
          %v694 = vld [vmem:[#allocation9 + $0x70] sm:$0xff]
          %v695 = vld [vmem:[#allocation9 + $0x78] sm:$0xff]
          %v696 = vld [vmem:[#allocation10] sm:$0xff]
          %v697 = vld [vmem:[#allocation10 + $0x8] sm:$0xff]
          %v698 = vld [vmem:[#allocation10 + $0x10] sm:$0xff]
          %v699 = vld [vmem:[#allocation10 + $0x18] sm:$0xff]
          %v700 = vld [vmem:[#allocation10 + $0x20] sm:$0xff]
          %v701 = vld [vmem:[#allocation10 + $0x28] sm:$0xff]
          %v702 = vld [vmem:[#allocation10 + $0x30] sm:$0xff]
          %v703 = vld [vmem:[#allocation10 + $0x38] sm:$0xff]
          %v704 = vld [vmem:[#allocation10 + $0x40] sm:$0xff]
          %v705 = vld [vmem:[#allocation10 + $0x48] sm:$0xff]
          %v706 = vld [vmem:[#allocation10 + $0x50] sm:$0xff]
          %v707 = vld [vmem:[#allocation10 + $0x58] sm:$0xff]
          %v708 = vld [vmem:[#allocation10 + $0x60] sm:$0xff]
          %v709 = vld [vmem:[#allocation10 + $0x68] sm:$0xff]
          %v710 = vld [vmem:[#allocation10 + $0x70] sm:$0xff]
          %v711 = vld [vmem:[#allocation10 + $0x78] sm:$0xff]
          %712 = vmatpush.msra.mxu0 %v711
          %713 = vmatpush.msra.mxu0 %v710
          %714 = vmatpush.msra.mxu0 %v709
          %715 = vmatpush.msra.mxu0 %v708
          %716 = vmatpush.msra.mxu0 %v707
          %717 = vmatpush.msra.mxu0 %v706
          %718 = vmatpush.msra.mxu0 %v705
          %719 = vmatpush.msra.mxu0 %v704
          %720 = vmatpush.msra.mxu0 %v703
          %721 = vmatpush.msra.mxu0 %v702
          %722 = vmatpush.msra.mxu0 %v701
          %723 = vmatpush.msra.mxu0 %v700
          %724 = vmatpush.msra.mxu0 %v699
          %725 = vmatpush.msra.mxu0 %v698
          %726 = vmatpush.msra.mxu0 %v697
          %727 = vmatpush.msra.mxu0 %v696
          %728 = vmatmul.f32.gmra.mxu0 %v679
          %v729 = vpop.f32.mrf.mxu0
          %v730 = vadd.f32 0.0, %v729
          %731 = vdwg.mxu0
          %732 = vmatpush.msra.mxu0 %v695
          %733 = vmatpush.msra.mxu0 %v694
          %734 = vmatpush.msra.mxu0 %v693
          %735 = vmatpush.msra.mxu0 %v692
          %736 = vmatpush.msra.mxu0 %v691
          %737 = vmatpush.msra.mxu0 %v690
          %738 = vmatpush.msra.mxu0 %v689
          %739 = vmatpush.msra.mxu0 %v688
          %740 = vmatpush.msra.mxu0 %v687
          %741 = vmatpush.msra.mxu0 %v686
          %742 = vmatpush.msra.mxu0 %v685
          %743 = vmatpush.msra.mxu0 %v684
          %744 = vmatpush.msra.mxu0 %v683
          %745 = vmatpush.msra.mxu0 %v682
          %746 = vmatpush.msra.mxu0 %v681
          %747 = vmatpush.msra.mxu0 %v680
          %748 = vmatmul.f32.gmra.mxu0 %v678
          %v749 = vpop.f32.mrf.mxu0
          %v750 = vadd.f32 %v730, %v749
          %751 = vdwg.mxu0
          %v752 = vld [vmem:[%s4] sm:$0x1]
          %v754 = vperm.slane %v752, 0
          %v756 = vadd.f32 %v750, %v754
          %v757 = vmax.f32 %v756, 0.0
          %v758 = vld [vmem:[#allocation12] sm:$0xff]
          %v759 = vld [vmem:[#allocation12 + $0x8] sm:$0xff]
          %v760 = vld [vmem:[#allocation12 + $0x10] sm:$0xff]
          %v761 = vld [vmem:[#allocation12 + $0x18] sm:$0xff]
          %v762 = vld [vmem:[#allocation12 + $0x20] sm:$0xff]
          %v763 = vld [vmem:[#allocation12 + $0x28] sm:$0xff]
          %v764 = vld [vmem:[#allocation12 + $0x30] sm:$0xff]
          %v765 = vld [vmem:[#allocation12 + $0x38] sm:$0xff]
          %v766 = vld [vmem:[#allocation12 + $0x40] sm:$0xff]
          %v767 = vld [vmem:[#allocation12 + $0x48] sm:$0xff]
          %v768 = vld [vmem:[#allocation12 + $0x50] sm:$0xff]
          %v769 = vld [vmem:[#allocation12 + $0x58] sm:$0xff]
          %v770 = vld [vmem:[#allocation12 + $0x60] sm:$0xff]
          %v771 = vld [vmem:[#allocation12 + $0x68] sm:$0xff]
          %v772 = vld [vmem:[#allocation12 + $0x70] sm:$0xff]
          %v773 = vld [vmem:[#allocation12 + $0x78] sm:$0xff]
          %v774 = vld [vmem:[%s6] sm:$0x1]
          %v776 = vperm.slane %v774, 0
          %778 = vmatpush.msra.mxu0 %v773
          %779 = vmatpush.msra.mxu0 %v772
          %780 = vmatpush.msra.mxu0 %v771
          %781 = vmatpush.msra.mxu0 %v770
          %782 = vmatpush.msra.mxu0 %v769
          %783 = vmatpush.msra.mxu0 %v768
          %784 = vmatpush.msra.mxu0 %v767
          %785 = vmatpush.msra.mxu0 %v766
          %786 = vmatpush.msra.mxu0 %v765
          %787 = vmatpush.msra.mxu0 %v764
          %788 = vmatpush.msra.mxu0 %v763
          %789 = vmatpush.msra.mxu0 %v762
          %790 = vmatpush.msra.mxu0 %v761
          %791 = vmatpush.msra.mxu0 %v760
          %792 = vmatpush.msra.mxu0 %v759
          %793 = vmatpush.msra.mxu0 %v758
          %794 = vmatmul.f32.gmra.mxu0 %v757
          %v795 = vpop.f32.mrf.mxu0
          %v796 = vadd.f32 %v776, %v795
          %797 = vdwg.mxu0
          %v798 = vmax.f32 %v796, 0.0
          %v799 = vld [vmem:[%s7] sm:$0x1]
          %s800 = sld [smem:[#allocation3]]
          %v801 = vstv %s800
          %802 = vmatpush.xpose.msra.mxu0 0.0
          %803 = vmatpush.xpose.msra.mxu0 0.0
          %804 = vmatpush.xpose.msra.mxu0 0.0
          %805 = vmatpush.xpose.msra.mxu0 0.0
          %806 = vmatpush.xpose.msra.mxu0 0.0
          %807 = vmatpush.xpose.msra.mxu0 0.0
          %808 = vmatpush.xpose.msra.mxu0 0.0
          %809 = vmatpush.xpose.msra.mxu0 0.0
          %810 = vmatpush.xpose.msra.mxu0 0.0
          %811 = vmatpush.xpose.msra.mxu0 0.0
          %812 = vmatpush.xpose.msra.mxu0 0.0
          %813 = vmatpush.xpose.msra.mxu0 0.0
          %814 = vmatpush.xpose.msra.mxu0 0.0
          %815 = vmatpush.xpose.msra.mxu0 0.0
          %816 = vmatpush.xpose.msra.mxu0 0.0
          %817 = vmatpush.xpose.msra.mxu0 %v798
          %818 = vmatmul.f32.gmra.mxu0 %v799
          %v819 = vpop.f32.mrf.mxu0
          %v820 = vadd.f32 %v801, %v819
          %821 = vdwg.mxu0
          %vm822 = vcmask 57344
          %v823 = vsel %vm822, %v820, -inf
          %824 = vmax.xlane.f32.xlu0 %v823
          %v825 = vpop.xlane.xlu0 %824
          %v826 = vsub.f32 %v820, %v825
          %v827 = vmul.f32 %v826, 1.442695
          %v828 = vpow.pop %v827
          %v829 = vsel %vm822, %v828, 0.0
          %830 = vadd.xlane.f32.xlu0 %v829
          %v831 = vpop.xlane.xlu0 %830
          %v832 = vrcp.pop %v831
          %v833 = vmul.f32 %v831, %v832
          %v834 = vsub.f32 1.0, %v833
          %v835 = vmul.f32 %v832, %v834
          %v836 = vadd.f32 %v832, %v835
          %vm837 = vweird.f32 %v831
          %vm838 = vweird.f32 %v832
          %vm839 = vmor %vm837, %vm838
          %v840 = vsel %vm839, %v832, %v836
          %v841 = vand.u32 2147483647, %v831
          %vm842 = vcmp.eq.f32.partialorder %v841, 8.507059e+37
          %v843 = vand.u32 %v831, 2147483648
          %v844 = vor.u32 1.1754944e-38, %v843
          %v845 = vsel %vm842, %v844, %v840
          %v846 = vmul.f32 %v828, %v845
          %847 = vst.msk [vmem:[#allocation13] sm:$0x1] %vm822, %v846
        $region88: #{tpu_custom_call.1} parent=55 // pred_fallthru
          _
        // Predicated region
        $region89: #{tpu_custom_call.1} parent=55 // pred_check
          %p848 = pneg %p234
        $region90: #{tpu_custom_call.1} parent=55 // pred_check_branch
          %850 = sbr.rel (%p848) target = $region92
        $region91: #{tpu_custom_call.1} parent=55 // pred_region
          %852 = vsyncadd [#allocation6], 0
          %s854 = sshll.u32 [#allocation13], 4
          %s855 = int_to_ptr.vmem [resolvable:$true] %s854
          %s856 = sshll.u32 %s9, 4
          %s857 = int_to_ptr.hbm [resolvable:$true] %s856
          %859 = dma.vmem_to_hbm [thread:$0]  %s855, 16, %s857, [#allocation6]
        $region92: #{tpu_custom_call.1} parent=55 // pred_fallthru
          _
        // Predicated region
        $region93: #{tpu_custom_call.1} parent=55 // pred_check
          %p860 = pneg %p234
        $region94: #{tpu_custom_call.1} parent=55 // pred_check_branch
          %862 = sbr.rel (%p860) target = $region96
        $region95: #{tpu_custom_call.1} parent=55 // pred_region
          %864 = dma.done [#allocation6], 16
        $region96: #{tpu_custom_call.1} parent=55 // pred_fallthru
          _
      $region56: #{tpu_custom_call.1} parent=5 // pred_fallthru
        _
      %p865 = scmp.le.s32.totalorder 2, %s22
      // Predicated region
      $region97: #{tpu_custom_call.1} parent=5 // pred_check
        %p866 = pneg %p865
      $region98: #{tpu_custom_call.1} parent=5 // pred_check_branch
        %868 = sbr.rel (%p866) target = $region100
      $region99: #{tpu_custom_call.1} parent=5 // pred_region
        %s869 = ssub.s32 %s22, 2
      $region100: #{tpu_custom_call.1} parent=5 // pred_fallthru
        _
    $region6: #{tpu_custom_call.1} parent=1 // loop_footer
      %s26 = sadd.s32 1, %s22
    $region7: #{tpu_custom_call.1} parent=1 // loop_footer_branch
      %21 = sbr.rel target = $region3
    $region8: #{tpu_custom_call.1} parent=1 // loop_exit
      _
    %870 = vsyncpa [#allocation5], 1
    %s871 = scalar_lea.sflag [#allocation5], 1
    %872 = vsyncpa %s871, 1
    %873 = vsyncpa [#allocation8], 1
    %874 = vsyncpa [#allocation11], 1
    %875 = vsyncpa [#allocation6], 1
    %s876 = scalar_lea.sflag [#allocation6], 1
    %877 = vsyncpa %s876, 1

// kernel: tpu_custom_call.1
$region0: #{tpu_custom_call.1}
  #allocation0 [shape = 'u32[]', space=smem, size = 0x4, offset = 0x4, fixed_abs, tag = 'smem constant byte address 0x4 - core index']
  #allocation1 [shape = 'u32[72,128]{1,0:T(1,128)}', space=vmem, size = 0x9000, scoped, tag = 'internal scratch']
  #allocation2 [shape = 'f32[8,128]{1,0:T(8,128)}', space=vmem, size = 0x1000, scoped, tag = 'scratch operand']
  #allocation3 [shape = 'f32[1,1]{1,0:T(1,128)S(6)}', space=smem, size = 0x200, scoped, tag = 'scoped memory for tpu_custom_call.1']
  #allocation14 [shape = 's32[]', space=sflag, size = 0x4, offset = 0, fixed_abs, tag = 'sflag constant byte address 0x0 - dummy sync flag']
  %s0 = inlined_call_operand.hbm [shape: f32[8,24,128], index: 0, kind: input, shape index: {}]
  %s1 = inlined_call_operand.hbm [shape: f32[8,128], index: 1, kind: input, shape index: {}]
  %s2 = inlined_call_operand.hbm [shape: f32[128,128], index: 2, kind: input, shape index: {}]
  %s3 = inlined_call_operand.hbm [shape: f32[128,128], index: 3, kind: input, shape index: {}]
  %s4 = inlined_call_operand.vmem [shape: f32[1,128], index: 4, kind: input, shape index: {}]
  %s5 = inlined_call_operand.hbm [shape: f32[128,128], index: 5, kind: input, shape index: {}]
  %s6 = inlined_call_operand.vmem [shape: f32[1,128], index: 6, kind: input, shape index: {}]
  %s7 = inlined_call_operand.vmem [shape: f32[1,128], index: 7, kind: input, shape index: {}]
  %s8 = inlined_call_operand.<no memory space> [shape: f32[1,1], index: 8, kind: input, shape index: {}]
  %s9 = inlined_call_operand.hbm [shape: f32[1,8], index: 9, kind: output, shape index: {}]
  %s10 = sld [smem:[#allocation0]]
  $region101: #{tpu_custom_call.1} parent=0
    _
  %s12 = ssub.s32 1, %s10
  %s13 = scalar_select 0, %s12, %s10
  %14 = sst [smem:[#allocation3]] %s8
  $region1: #{tpu_custom_call.1} parent=0
    #allocation4 [shape = 'u8[131072]{0}', space=vmem, size = 0x20000, scoped, tag = 'input window, operand 0']
    #allocation5 [shape = 's32[2]{0}', space=sflag, size = 0x8, scoped, tag = 'scoped memory for tpu_custom_call.1']
    #allocation6 [shape = 's32[2]{0}', space=sflag, size = 0x8, scoped, tag = 'scoped memory for tpu_custom_call.1']
    #allocation7 [shape = 'u8[4096]{0}', space=vmem, size = 0x1000, scoped, tag = 'input window, operand 1, single buffered']
    #allocation8 [shape = 's32[1]{0}', space=sflag, size = 0x4, scoped, tag = 'scoped memory for tpu_custom_call.1']
    #allocation9 [shape = 'u8[65536]{0}', space=vmem, size = 0x10000, scoped, tag = 'input window, operand 2, single buffered']
    #allocation10 [shape = 'u8[65536]{0}', space=vmem, size = 0x10000, scoped, tag = 'input window, operand 3, single buffered']
    #allocation11 [shape = 's32[1]{0}', space=sflag, size = 0x4, scoped, tag = 'scoped memory for tpu_custom_call.1']
    #allocation12 [shape = 'u8[65536]{0}', space=vmem, size = 0x10000, scoped, tag = 'input window, operand 5, single buffered']
    #allocation13 [shape = 'u8[512]{0}', space=vmem, size = 0x400, scoped, tag = 'output window, operand 0, single buffered']
    %15 = vsyncpa [#allocation5], 0
    %s16 = scalar_lea.sflag [#allocation5], 1
    %17 = vsyncpa %s16, 0
    %18 = vsyncpa [#allocation8], 0
    %19 = vsyncpa [#allocation11], 0
    %20 = vsyncpa [#allocation6], 0
    loop: start=0, step=1, limit=4
    $region2: #{tpu_custom_call.1} parent=1 // loop_pre_header
      _
    $region3: #{tpu_custom_call.1} parent=1 // loop_header
      %s22 = sphi 0, %s26
      %p23 = scmp.ge.s32.totalorder %s22, 4
      %s32 = sphi 0, %s34
      %s35 = sphi 0, %s32
      %s36 = sphi 0, %s35
      %s52 = sphi 0, %s36
      %s56 = sphi 0, %s56
      %s58 = sphi 0, %s56
      %s59 = sphi 0, %s58
      %s73 = sphi 0, %s59
      %s77 = sphi 0, %s77
      %s79 = sphi 0, %s77
      %s80 = sphi 0, %s79
      %s94 = sphi 0, %s80
      %s98 = sphi 0, %s98
      %s100 = sphi 0, %s98
      %s101 = sphi 0, %s100
      %s115 = sphi 0, %s101
      %s119 = sphi 0, %s119
      %s121 = sphi 0, %s119
      %s122 = sphi 0, %s121
      %s136 = sphi 0, %s122
      %s140 = sphi 0, %s140
      %s142 = sphi 0, %s140
      %s143 = sphi 0, %s142
      %s157 = sphi 0, %s143
      %s161 = sphi 0, %s161
      %s163 = sphi 0, %s161
      %s164 = sphi 0, %s163
      %s178 = sphi 0, %s164
      %s182 = sphi 0, %s182
      %s184 = sphi 0, %s182
      %s185 = sphi 0, %s184
      %s199 = sphi 0, %s185
      %s203 = sphi 0, %s203
      %s205 = sphi 0, %s203
      %s206 = sphi 0, %s205
      %s220 = sphi 0, %s206
      %s224 = sphi 0, %s224
      %s226 = sphi 0, %s224
      %s227 = sphi 0, %s226
      %s241 = sphi 0, %s227
    $region4: #{tpu_custom_call.1} parent=1 // loop_header_branch
      %25 = sbr.rel (%p23) target = $region8
    $region5: #{tpu_custom_call.1} parent=1 // loop_body
      %s27 = ssub.s32 %s22, 1
      %s28 = ssub.s32 %s22, 2
      %s29 = sadd.s32 %s22, 1
      %s30 = ssub.s32 %s22, %s29
      %p31 = scmp.eq.s32.totalorder %s30, 0
      %s33 = sadd.s32 %s32, 1
      %s34 = scalar_select %p31, %s32, %s33
      %p37 = pneg %p31
      %p38 = scmp.eq.s32.totalorder %s22, 1
      %p39 = por %p37, %p38
      %p40 = scmp.ne.s32.totalorder %s32, %s35
      %p41 = scmp.eq.s32.totalorder %s22, 0
      %p42 = por %p40, %p41
      %p43 = scmp.ne.s32.totalorder %s32, %s35
      %p44 = scmp.eq.s32.totalorder %s27, 1
      %p45 = por %p43, %p44
      %p46 = scmp.ne.s32.totalorder %s35, %s36
      %p47 = scmp.eq.s32.totalorder %s27, 0
      %p48 = por %p46, %p47
      %p49 = scmp.ne.s32.totalorder %s35, %s36
      %p50 = scmp.eq.s32.totalorder %s28, 1
      %p51 = por %p49, %p50
      %p53 = scmp.ne.s32.totalorder %s36, %s52
      %p54 = scmp.eq.s32.totalorder %s28, 0
      %p55 = por %p53, %p54
      %s57 = sadd.s32 %s56, 1
      %p60 = scmp.eq.s32.totalorder %s22, 1
      %p61 = scmp.ne.s32.totalorder %s56, %s58
      %p62 = scmp.eq.s32.totalorder %s22, 0
      %p63 = por %p61, %p62
      %p64 = scmp.ne.s32.totalorder %s56, %s58
      %p65 = scmp.eq.s32.totalorder %s27, 1
      %p66 = por %p64, %p65
      %p67 = scmp.ne.s32.totalorder %s58, %s59
      %p68 = scmp.eq.s32.totalorder %s27, 0
      %p69 = por %p67, %p68
      %p70 = scmp.ne.s32.totalorder %s58, %s59
      %p71 = scmp.eq.s32.totalorder %s28, 1
      %p72 = por %p70, %p71
      %p74 = scmp.ne.s32.totalorder %s59, %s73
      %p75 = scmp.eq.s32.totalorder %s28, 0
      %p76 = por %p74, %p75
      %s78 = sadd.s32 %s77, 1
      %p81 = scmp.eq.s32.totalorder %s22, 1
      %p82 = scmp.ne.s32.totalorder %s77, %s79
      %p83 = scmp.eq.s32.totalorder %s22, 0
      %p84 = por %p82, %p83
      %p85 = scmp.ne.s32.totalorder %s77, %s79
      %p86 = scmp.eq.s32.totalorder %s27, 1
      %p87 = por %p85, %p86
      %p88 = scmp.ne.s32.totalorder %s79, %s80
      %p89 = scmp.eq.s32.totalorder %s27, 0
      %p90 = por %p88, %p89
      %p91 = scmp.ne.s32.totalorder %s79, %s80
      %p92 = scmp.eq.s32.totalorder %s28, 1
      %p93 = por %p91, %p92
      %p95 = scmp.ne.s32.totalorder %s80, %s94
      %p96 = scmp.eq.s32.totalorder %s28, 0
      %p97 = por %p95, %p96
      %s99 = sadd.s32 %s98, 1
      %p102 = scmp.eq.s32.totalorder %s22, 1
      %p103 = scmp.ne.s32.totalorder %s98, %s100
      %p104 = scmp.eq.s32.totalorder %s22, 0
      %p105 = por %p103, %p104
      %p106 = scmp.ne.s32.totalorder %s98, %s100
      %p107 = scmp.eq.s32.totalorder %s27, 1
      %p108 = por %p106, %p107
      %p109 = scmp.ne.s32.totalorder %s100, %s101
      %p110 = scmp.eq.s32.totalorder %s27, 0
      %p111 = por %p109, %p110
      %p112 = scmp.ne.s32.totalorder %s100, %s101
      %p113 = scmp.eq.s32.totalorder %s28, 1
      %p114 = por %p112, %p113
      %p116 = scmp.ne.s32.totalorder %s101, %s115
      %p117 = scmp.eq.s32.totalorder %s28, 0
      %p118 = por %p116, %p117
      %s120 = sadd.s32 %s119, 1
      %p123 = scmp.eq.s32.totalorder %s22, 1
      %p124 = scmp.ne.s32.totalorder %s119, %s121
      %p125 = scmp.eq.s32.totalorder %s22, 0
      %p126 = por %p124, %p125
      %p127 = scmp.ne.s32.totalorder %s119, %s121
      %p128 = scmp.eq.s32.totalorder %s27, 1
      %p129 = por %p127, %p128
      %p130 = scmp.ne.s32.totalorder %s121, %s122
      %p131 = scmp.eq.s32.totalorder %s27, 0
      %p132 = por %p130, %p131
      %p133 = scmp.ne.s32.totalorder %s121, %s122
      %p134 = scmp.eq.s32.totalorder %s28, 1
      %p135 = por %p133, %p134
      %p137 = scmp.ne.s32.totalorder %s122, %s136
      %p138 = scmp.eq.s32.totalorder %s28, 0
      %p139 = por %p137, %p138
      %s141 = sadd.s32 %s140, 1
      %p144 = scmp.eq.s32.totalorder %s22, 1
      %p145 = scmp.ne.s32.totalorder %s140, %s142
      %p146 = scmp.eq.s32.totalorder %s22, 0
      %p147 = por %p145, %p146
      %p148 = scmp.ne.s32.totalorder %s140, %s142
      %p149 = scmp.eq.s32.totalorder %s27, 1
      %p150 = por %p148, %p149
      %p151 = scmp.ne.s32.totalorder %s142, %s143
      %p152 = scmp.eq.s32.totalorder %s27, 0
      %p153 = por %p151, %p152
      %p154 = scmp.ne.s32.totalorder %s142, %s143
      %p155 = scmp.eq.s32.totalorder %s28, 1
      %p156 = por %p154, %p155
      %p158 = scmp.ne.s32.totalorder %s143, %s157
      %p159 = scmp.eq.s32.totalorder %s28, 0
      %p160 = por %p158, %p159
      %s162 = sadd.s32 %s161, 1
      %p165 = scmp.eq.s32.totalorder %s22, 1
      %p166 = scmp.ne.s32.totalorder %s161, %s163
      %p167 = scmp.eq.s32.totalorder %s22, 0
      %p168 = por %p166, %p167
      %p169 = scmp.ne.s32.totalorder %s161, %s163
      %p170 = scmp.eq.s32.totalorder %s27, 1
      %p171 = por %p169, %p170
      %p172 = scmp.ne.s32.totalorder %s163, %s164
      %p173 = scmp.eq.s32.totalorder %s27, 0
      %p174 = por %p172, %p173
      %p175 = scmp.ne.s32.totalorder %s163, %s164
      %p176 = scmp.eq.s32.totalorder %s28, 1
      %p177 = por %p175, %p176
      %p179 = scmp.ne.s32.totalorder %s164, %s178
      %p180 = scmp.eq.s32.totalorder %s28, 0
      %p181 = por %p179, %p180
      %s183 = sadd.s32 %s182, 1
      %p186 = scmp.eq.s32.totalorder %s22, 1
      %p187 = scmp.ne.s32.totalorder %s182, %s184
      %p188 = scmp.eq.s32.totalorder %s22, 0
      %p189 = por %p187, %p188
      %p190 = scmp.ne.s32.totalorder %s182, %s184
      %p191 = scmp.eq.s32.totalorder %s27, 1
      %p192 = por %p190, %p191
      %p193 = scmp.ne.s32.totalorder %s184, %s185
      %p194 = scmp.eq.s32.totalorder %s27, 0
      %p195 = por %p193, %p194
      %p196 = scmp.ne.s32.totalorder %s184, %s185
      %p197 = scmp.eq.s32.totalorder %s28, 1
      %p198 = por %p196, %p197
      %p200 = scmp.ne.s32.totalorder %s185, %s199
      %p201 = scmp.eq.s32.totalorder %s28, 0
      %p202 = por %p200, %p201
      %s204 = sadd.s32 %s203, 1
      %p207 = scmp.eq.s32.totalorder %s22, 1
      %p208 = scmp.ne.s32.totalorder %s203, %s205
      %p209 = scmp.eq.s32.totalorder %s22, 0
      %p210 = por %p208, %p209
      %p211 = scmp.ne.s32.totalorder %s203, %s205
      %p212 = scmp.eq.s32.totalorder %s27, 1
      %p213 = por %p211, %p212
      %p214 = scmp.ne.s32.totalorder %s205, %s206
      %p215 = scmp.eq.s32.totalorder %s27, 0
      %p216 = por %p214, %p215
      %p217 = scmp.ne.s32.totalorder %s205, %s206
      %p218 = scmp.eq.s32.totalorder %s28, 1
      %p219 = por %p217, %p218
      %p221 = scmp.ne.s32.totalorder %s206, %s220
      %p222 = scmp.eq.s32.totalorder %s28, 0
      %p223 = por %p221, %p222
      %s225 = sadd.s32 %s224, 1
      %p228 = scmp.eq.s32.totalorder %s22, 1
      %p229 = scmp.ne.s32.totalorder %s224, %s226
      %p230 = scmp.eq.s32.totalorder %s22, 0
      %p231 = por %p229, %p230
      %p232 = scmp.ne.s32.totalorder %s224, %s226
      %p233 = scmp.eq.s32.totalorder %s27, 1
      %p234 = por %p232, %p233
      %p235 = scmp.ne.s32.totalorder %s226, %s227
      %p236 = scmp.eq.s32.totalorder %s27, 0
      %p237 = por %p235, %p236
      %p238 = scmp.ne.s32.totalorder %s226, %s227
      %p239 = scmp.eq.s32.totalorder %s28, 1
      %p240 = por %p238, %p239
      %p242 = scmp.ne.s32.totalorder %s227, %s241
      %p243 = scmp.eq.s32.totalorder %s28, 0
      %p244 = por %p242, %p243
      %p245 = scmp.le.s32.totalorder 1, %s22
      %p246 = scmp.lt.s32.totalorder %s22, 3
      %p247 = pnand %p245, %p246
      %p248 = pneg %p247
      // Predicated region
      $region9: #{tpu_custom_call.1} parent=5 // pred_check
        _
      $region10: #{tpu_custom_call.1} parent=5 // pred_check_branch
        %250 = sbr.rel (%p247) target = $region12
      $region11: #{tpu_custom_call.1} parent=5 // pred_region
        %s251 = ssub.s32 %s22, 1
        // Predicated region
        $region13: #{tpu_custom_call.1} parent=11 // pred_check
          %p252 = pneg %p69
        $region14: #{tpu_custom_call.1} parent=11 // pred_check_branch
          %254 = sbr.rel (%p252) target = $region16
        $region15: #{tpu_custom_call.1} parent=11 // pred_region
          %256 = vsyncadd [#allocation8], 0
          %s258 = sshll.u32 %s1, 4
          %s259 = int_to_ptr.hbm [resolvable:$true] %s258
          %s260 = sshll.u32 [#allocation7], 4
          %s261 = int_to_ptr.vmem [resolvable:$true] %s260
          %263 = dma.hbm_to_vmem [thread:$0]  %s259, 128, %s261, [#allocation8]
        $region16: #{tpu_custom_call.1} parent=11 // pred_fallthru
          _
        // Predicated region
        $region17: #{tpu_custom_call.1} parent=11 // pred_check
          %p264 = pneg %p90
        $region18: #{tpu_custom_call.1} parent=11 // pred_check_branch
          %266 = sbr.rel (%p264) target = $region20
        $region19: #{tpu_custom_call.1} parent=11 // pred_region
          %268 = vsyncadd [#allocation8], 0
          %s269 = sshll.u32 %s2, 4
          %s270 = int_to_ptr.hbm [resolvable:$true] %s269
          %s271 = sshll.u32 [#allocation9], 4
          %s272 = int_to_ptr.vmem [resolvable:$true] %s271
          %277 = dma.hbm_to_vmem [thread:$0]  %s270, 2048, %s272, [#allocation8], 128, 128, 8
        $region20: #{tpu_custom_call.1} parent=11 // pred_fallthru
          _
        // Predicated region
        $region21: #{tpu_custom_call.1} parent=11 // pred_check
          %p278 = pneg %p111
        $region22: #{tpu_custom_call.1} parent=11 // pred_check_branch
          %280 = sbr.rel (%p278) target = $region24
        $region23: #{tpu_custom_call.1} parent=11 // pred_region
          %282 = vsyncadd [#allocation11], 0
          %s283 = sshll.u32 %s3, 4
          %s284 = int_to_ptr.hbm [resolvable:$true] %s283
          %s285 = sshll.u32 [#allocation10], 4
          %s286 = int_to_ptr.vmem [resolvable:$true] %s285
          %291 = dma.hbm_to_vmem [thread:$0]  %s284, 2048, %s286, [#allocation11], 128, 128, 8
        $region24: #{tpu_custom_call.1} parent=11 // pred_fallthru
          _
        // Predicated region
        $region25: #{tpu_custom_call.1} parent=11 // pred_check
          %p292 = pneg %p132
        $region26: #{tpu_custom_call.1} parent=11 // pred_check_branch
          %294 = sbr.rel (%p292) target = $region28
        $region27: #{tpu_custom_call.1} parent=11 // pred_region
          _
        $region28: #{tpu_custom_call.1} parent=11 // pred_fallthru
          _
        // Predicated region
        $region29: #{tpu_custom_call.1} parent=11 // pred_check
          %p295 = pneg %p153
        $region30: #{tpu_custom_call.1} parent=11 // pred_check_branch
          %297 = sbr.rel (%p295) target = $region32
        $region31: #{tpu_custom_call.1} parent=11 // pred_region
          %299 = vsyncadd [#allocation11], 0
          %s300 = sshll.u32 %s5, 4
          %s301 = int_to_ptr.hbm [resolvable:$true] %s300
          %s302 = sshll.u32 [#allocation12], 4
          %s303 = int_to_ptr.vmem [resolvable:$true] %s302
          %308 = dma.hbm_to_vmem [thread:$0]  %s301, 2048, %s303, [#allocation11], 128, 128, 8
        $region32: #{tpu_custom_call.1} parent=11 // pred_fallthru
          _
        // Predicated region
        $region33: #{tpu_custom_call.1} parent=11 // pred_check
          %p309 = pneg %p174
        $region34: #{tpu_custom_call.1} parent=11 // pred_check_branch
          %311 = sbr.rel (%p309) target = $region36
        $region35: #{tpu_custom_call.1} parent=11 // pred_region
          _
        $region36: #{tpu_custom_call.1} parent=11 // pred_fallthru
          _
        // Predicated region
        $region37: #{tpu_custom_call.1} parent=11 // pred_check
          %p312 = pneg %p195
        $region38: #{tpu_custom_call.1} parent=11 // pred_check_branch
          %314 = sbr.rel (%p312) target = $region40
        $region39: #{tpu_custom_call.1} parent=11 // pred_region
          _
        $region40: #{tpu_custom_call.1} parent=11 // pred_fallthru
          _
        // Predicated region
        $region41: #{tpu_custom_call.1} parent=11 // pred_check
          %p315 = pneg %p216
        $region42: #{tpu_custom_call.1} parent=11 // pred_check_branch
          %317 = sbr.rel (%p315) target = $region44
        $region43: #{tpu_custom_call.1} parent=11 // pred_region
          _
        $region44: #{tpu_custom_call.1} parent=11 // pred_fallthru
          _
      $region12: #{tpu_custom_call.1} parent=5 // pred_fallthru
        _
      %p318 = scmp.lt.s32.totalorder %s22, 2
      // Predicated region
      $region45: #{tpu_custom_call.1} parent=5 // pred_check
        %p319 = pneg %p318
      $region46: #{tpu_custom_call.1} parent=5 // pred_check_branch
        %321 = sbr.rel (%p319) target = $region48
      $region47: #{tpu_custom_call.1} parent=5 // pred_region
        // Predicated region
        $region49: #{tpu_custom_call.1} parent=47 // pred_check
          %p322 = pneg %p42
        $region50: #{tpu_custom_call.1} parent=47 // pred_check_branch
          %324 = sbr.rel (%p322) target = $region52
        $region51: #{tpu_custom_call.1} parent=47 // pred_region
          #allocation15 [shape = 'u32[6]{0}', space=smem, size = 0x18, scoped, tag = 'DMA stride descriptor']
          %s325 = sand.u32 %s32, 1
          %s326 = scalar_lea.sflag [#allocation5], %s325
          %s327 = sand.u32 %s32, 1
          %s328 = smul.addr %s327, 128
          %s329 = scalar_lea.vmem [#allocation4], %s328
          %s330 = smul.u32 2, %s22
          %s331 = ssub.s32 3, %s330
          %p332 = scmp.lt.s32.totalorder %s331, 2
          %s333 = scalar_select %p332, %s331, 2
          %s334 = smul.u32 64, %s333
          %s335 = ssub.s32 128, %s334
          %s336 = sshll.u32 %s335, 4
          %337 = vsyncadd %s326, %s336
          %p338 = scmp.ne.s32.totalorder 0, %s334
          %s339 = smul.addr %s330, 8
          %s340 = scalar_lea.hbm %s0, %s339
          %s341 = smul.u32 8, %s333
          %s342 = smul.u32 %s341, 8
          %s344 = sshll.u32 1, 14
          %s345 = sxor.u32 4294967295, %s344
          %s347 = sld [smem:[#allocation0]]
          %s348 = sadd.s32 2, %s347
          %s350 = sshll.u32 7, 26
          %s351 = sxor.u32 4294967295, %s350
          %s352 = sand.u32 0, %s351
          %s353 = sshll.u32 %s348, 26
          %s354 = sor.u32 %s352, %s353
          %s355 = sshll.u32 %s340, 4
          %s356 = int_to_ptr.hbm [resolvable:$true] %s355
          %s357 = sshll.u32 %s329, 4
          %s358 = int_to_ptr.vmem [resolvable:$true] %s357
          %s359 = sshll.u32 %s342, 4
          %364 = sst [smem:[#allocation15]] 384
          %s365 = scalar_lea.smem [#allocation15], 1
          %366 = sst [smem:[%s365]] 256
          %s367 = scalar_lea.smem [#allocation15], 2
          %368 = sst [smem:[%s367]] %s333
          %s369 = scalar_lea.smem [#allocation15], 3
          %370 = sst [smem:[%s369]] 128
          %s371 = scalar_lea.smem [#allocation15], 4
          %372 = sst [smem:[%s371]] 128
          %s373 = scalar_lea.smem [#allocation15], 5
          %374 = sst [smem:[%s373]] 8
          %376 = dma.general (%p338), %s356, %s359, %s358, %s326, [#allocation14], [#allocation15], %s354, 0
        $region52: #{tpu_custom_call.1} parent=47 // pred_fallthru
          _
      $region48: #{tpu_custom_call.1} parent=5 // pred_fallthru
        _
      %p377 = scmp.le.s32.totalorder 1, %s22
      %p378 = scmp.lt.s32.totalorder %s22, 3
      %p379 = pnand %p377, %p378
      %p380 = pneg %p379
      // Predicated region
      $region53: #{tpu_custom_call.1} parent=5 // pred_check
        _
      $region54: #{tpu_custom_call.1} parent=5 // pred_check_branch
        %382 = sbr.rel (%p379) target = $region56
      $region55: #{tpu_custom_call.1} parent=5 // pred_region
        %s383 = ssub.s32 %s22, 1
        %s384 = sand.u32 %s35, 1
        %s385 = scalar_lea.sflag [#allocation5], %s384
        %s386 = sand.u32 %s35, 1
        %s387 = smul.addr %s386, 128
        %s388 = scalar_lea.vmem [#allocation4], %s387
        // Predicated region
        $region57: #{tpu_custom_call.1} parent=55 // pred_check
          %p389 = pneg %p48
        $region58: #{tpu_custom_call.1} parent=55 // pred_check_branch
          %391 = sbr.rel (%p389) target = $region60
        $region59: #{tpu_custom_call.1} parent=55 // pred_region
          %393 = dma.done %s385, 2048
        $region60: #{tpu_custom_call.1} parent=55 // pred_fallthru
          _
        // Predicated region
        $region61: #{tpu_custom_call.1} parent=55 // pred_check
          %p394 = pneg %p69
        $region62: #{tpu_custom_call.1} parent=55 // pred_check_branch
          %396 = sbr.rel (%p394) target = $region64
        $region63: #{tpu_custom_call.1} parent=55 // pred_region
          %398 = dma.done [#allocation8], 128
        $region64: #{tpu_custom_call.1} parent=55 // pred_fallthru
          _
        // Predicated region
        $region65: #{tpu_custom_call.1} parent=55 // pred_check
          %p399 = pneg %p90
        $region66: #{tpu_custom_call.1} parent=55 // pred_check_branch
          %401 = sbr.rel (%p399) target = $region68
        $region67: #{tpu_custom_call.1} parent=55 // pred_region
          %403 = dma.done [#allocation8], 2048
        $region68: #{tpu_custom_call.1} parent=55 // pred_fallthru
          _
        // Predicated region
        $region69: #{tpu_custom_call.1} parent=55 // pred_check
          %p404 = pneg %p111
        $region70: #{tpu_custom_call.1} parent=55 // pred_check_branch
          %406 = sbr.rel (%p404) target = $region72
        $region71: #{tpu_custom_call.1} parent=55 // pred_region
          %408 = dma.done [#allocation11], 2048
        $region72: #{tpu_custom_call.1} parent=55 // pred_fallthru
          _
        // Predicated region
        $region73: #{tpu_custom_call.1} parent=55 // pred_check
          %p409 = pneg %p153
        $region74: #{tpu_custom_call.1} parent=55 // pred_check_branch
          %411 = sbr.rel (%p409) target = $region76
        $region75: #{tpu_custom_call.1} parent=55 // pred_region
          %413 = dma.done [#allocation11], 2048
        $region76: #{tpu_custom_call.1} parent=55 // pred_fallthru
          _
        %s414 = sand.u32 %s35, 1
        %s415 = scalar_lea.sflag [#allocation5], %s414
        %s416 = sand.u32 %s35, 1
        %s417 = smul.addr %s416, 128
        %s418 = scalar_lea.vmem [#allocation4], %s417
        %p419 = pneg %p48
        %p420 = pneg %p45
        %p421 = pneg %p69
        %p422 = pneg %p66
        %p423 = pneg %p90
        %p424 = pneg %p87
        %p425 = pneg %p111
        %p426 = pneg %p108
        %p427 = pneg %p132
        %p428 = pneg %p129
        %p429 = pneg %p153
        %p430 = pneg %p150
        %p431 = pneg %p174
        %p432 = pneg %p171
        %p433 = pneg %p195
        %p434 = pneg %p192
        %p435 = pneg %p216
        %p436 = pneg %p213
        %p437 = pneg %p237
        %p438 = pneg %p234
        %s439 = smul.u32 2, %s27
        %s440 = ssub.s32 3, %s439
        %p441 = scmp.lt.s32.totalorder %s440, 2
        %s442 = scalar_select %p441, %s440, 2
        %s443 = smul.u32 64, %s442
        %p444 = scmp.eq.s32.totalorder %s27, 0
        // Predicated region
        $region77: #{tpu_custom_call.1} parent=55 // pred_check
          %p445 = pneg %p444
        $region78: #{tpu_custom_call.1} parent=55 // pred_check_branch
          %447 = sbr.rel (%p445) target = $region80
        $region79: #{tpu_custom_call.1} parent=55 // pred_region
          %448 = vst [vmem:[#allocation2] sm:$0xff] 0.0
        $region80: #{tpu_custom_call.1} parent=55 // pred_fallthru
          _
        %p449 = scmp.lt.s32.totalorder %s27, 1
        // Predicated region
        $region81: #{tpu_custom_call.1} parent=55 // pred_check
          %p450 = pneg %p449
        $region82: #{tpu_custom_call.1} parent=55 // pred_check_branch
          %452 = sbr.rel (%p450) target = $region84
        $region83: #{tpu_custom_call.1} parent=55 // pred_region
          %v453 = vld [vmem:[#allocation2] sm:$0xff]
          %v454 = vld [vmem:[%s388] sm:$0xff]
          %v455 = vld [vmem:[%s388 + $0x8] sm:$0xff]
          %v456 = vld [vmem:[%s388 + $0x10] sm:$0xff]
          %v457 = vld [vmem:[%s388 + $0x18] sm:$0xff]
          %v458 = vld [vmem:[%s388 + $0x20] sm:$0xff]
          %v459 = vld [vmem:[%s388 + $0x28] sm:$0xff]
          %v460 = vld [vmem:[%s388 + $0x30] sm:$0xff]
          %v461 = vld [vmem:[%s388 + $0x38] sm:$0xff]
          %v462 = vld [vmem:[%s388 + $0x40] sm:$0xff]
          %v463 = vld [vmem:[%s388 + $0x48] sm:$0xff]
          %v464 = vld [vmem:[%s388 + $0x50] sm:$0xff]
          %v465 = vld [vmem:[%s388 + $0x58] sm:$0xff]
          %v466 = vld [vmem:[%s388 + $0x60] sm:$0xff]
          %v467 = vld [vmem:[%s388 + $0x68] sm:$0xff]
          %v468 = vld [vmem:[%s388 + $0x70] sm:$0xff]
          %v469 = vld [vmem:[%s388 + $0x78] sm:$0xff]
          %v470 = vadd.f32 %v454, %v455
          %v471 = vrot.slane %v470, 4
          %v472 = vadd.f32 %v470, %v471
          %v473 = vrot.slane %v472, 2
          %v474 = vadd.f32 %v472, %v473
          %v475 = vrot.slane %v474, 1
          %v476 = vadd.f32 %v474, %v475
          %v477 = vadd.f32 %v456, %v457
          %v478 = vrot.slane %v477, 4
          %v479 = vadd.f32 %v477, %v478
          %v480 = vrot.slane %v479, 2
          %v481 = vadd.f32 %v479, %v480
          %v482 = vrot.slane %v481, 1
          %v483 = vadd.f32 %v481, %v482
          %v484 = vadd.f32 %v458, %v459
          %v485 = vrot.slane %v484, 4
          %v486 = vadd.f32 %v484, %v485
          %v487 = vrot.slane %v486, 2
          %v488 = vadd.f32 %v486, %v487
          %v489 = vrot.slane %v488, 1
          %v490 = vadd.f32 %v488, %v489
          %v491 = vadd.f32 %v460, %v461
          %v492 = vrot.slane %v491, 4
          %v493 = vadd.f32 %v491, %v492
          %v494 = vrot.slane %v493, 2
          %v495 = vadd.f32 %v493, %v494
          %v496 = vrot.slane %v495, 1
          %v497 = vadd.f32 %v495, %v496
          %v498 = vadd.f32 %v462, %v463
          %v499 = vrot.slane %v498, 4
          %v500 = vadd.f32 %v498, %v499
          %v501 = vrot.slane %v500, 2
          %v502 = vadd.f32 %v500, %v501
          %v503 = vrot.slane %v502, 1
          %v504 = vadd.f32 %v502, %v503
          %v505 = vadd.f32 %v464, %v465
          %v506 = vrot.slane %v505, 4
          %v507 = vadd.f32 %v505, %v506
          %v508 = vrot.slane %v507, 2
          %v509 = vadd.f32 %v507, %v508
          %v510 = vrot.slane %v509, 1
          %v511 = vadd.f32 %v509, %v510
          %v512 = vadd.f32 %v466, %v467
          %v513 = vrot.slane %v512, 4
          %v514 = vadd.f32 %v512, %v513
          %v515 = vrot.slane %v514, 2
          %v516 = vadd.f32 %v514, %v515
          %v517 = vrot.slane %v516, 1
          %v518 = vadd.f32 %v516, %v517
          %v519 = vadd.f32 %v468, %v469
          %v520 = vrot.slane %v519, 4
          %v521 = vadd.f32 %v519, %v520
          %v522 = vrot.slane %v521, 2
          %v523 = vadd.f32 %v521, %v522
          %v524 = vrot.slane %v523, 1
          %v525 = vadd.f32 %v523, %v524
          %vm534 = vcmask 1041409
          %v535 = vsel %vm534, %v483, %v476
          %vm536 = vcmask 1042434
          %v537 = vsel %vm536, %v490, %v535
          %vm538 = vcmask 1043459
          %v539 = vsel %vm538, %v497, %v537
          %vm540 = vcmask 1044484
          %v541 = vsel %vm540, %v504, %v539
          %vm542 = vcmask 1045509
          %v543 = vsel %vm542, %v511, %v541
          %vm544 = vcmask 1046534
          %v545 = vsel %vm544, %v518, %v543
          %vm546 = vcmask 1047559
          %v547 = vsel %vm546, %v525, %v545
          %v549 = vadd.f32 %v453, %v547
          %550 = vst [vmem:[#allocation2] sm:$0xff] %v549
        $region84: #{tpu_custom_call.1} parent=55 // pred_fallthru
          _
        %p551 = scmp.eq.s32.totalorder %s27, 1
        // Predicated region
        $region85: #{tpu_custom_call.1} parent=55 // pred_check
          %p552 = pneg %p551
        $region86: #{tpu_custom_call.1} parent=55 // pred_check_branch
          %554 = sbr.rel (%p552) target = $region88
        $region87: #{tpu_custom_call.1} parent=55 // pred_region
          %s555 = smul.u32 %s27, 16
          %s556 = ssub.s32 24, %s555
          %v557 = vlaneseq
          %v558 = vshrl.u32 %v557, 7
          %v559 = vadd.s32 %v558, 8
          %v560 = vstv %s556
          %vm561 = vcmp.lt.s32.totalorder %v558, %v560
          %vm562 = vcmp.lt.s32.totalorder %v559, %v560
          %v563 = vld [vmem:[%s388] sm:$0xff]
          %v564 = vld [vmem:[%s388 + $0x8] sm:$0xff]
          %v565 = vld [vmem:[%s388 + $0x10] sm:$0xff]
          %v566 = vld [vmem:[%s388 + $0x18] sm:$0xff]
          %v567 = vld [vmem:[%s388 + $0x20] sm:$0xff]
          %v568 = vld [vmem:[%s388 + $0x28] sm:$0xff]
          %v569 = vld [vmem:[%s388 + $0x30] sm:$0xff]
          %v570 = vld [vmem:[%s388 + $0x38] sm:$0xff]
          %v571 = vld [vmem:[%s388 + $0x40] sm:$0xff]
          %v572 = vld [vmem:[%s388 + $0x48] sm:$0xff]
          %v573 = vld [vmem:[%s388 + $0x50] sm:$0xff]
          %v574 = vld [vmem:[%s388 + $0x58] sm:$0xff]
          %v575 = vld [vmem:[%s388 + $0x60] sm:$0xff]
          %v576 = vld [vmem:[%s388 + $0x68] sm:$0xff]
          %v577 = vld [vmem:[%s388 + $0x70] sm:$0xff]
          %v578 = vld [vmem:[%s388 + $0x78] sm:$0xff]
          %v579 = vsel %vm561, %v563, 0.0
          %v580 = vsel %vm562, %v564, 0.0
          %v581 = vsel %vm561, %v565, 0.0
          %v582 = vsel %vm562, %v566, 0.0
          %v583 = vsel %vm561, %v567, 0.0
          %v584 = vsel %vm562, %v568, 0.0
          %v585 = vsel %vm561, %v569, 0.0
          %v586 = vsel %vm562, %v570, 0.0
          %v587 = vsel %vm561, %v571, 0.0
          %v588 = vsel %vm562, %v572, 0.0
          %v589 = vsel %vm561, %v573, 0.0
          %v590 = vsel %vm562, %v574, 0.0
          %v591 = vsel %vm561, %v575, 0.0
          %v592 = vsel %vm562, %v576, 0.0
          %v593 = vsel %vm561, %v577, 0.0
          %v594 = vsel %vm562, %v578, 0.0
          %v595 = vld [vmem:[#allocation2] sm:$0xff]
          %v596 = vadd.f32 %v579, %v580
          %v597 = vrot.slane %v596, 4
          %v598 = vadd.f32 %v596, %v597
          %v599 = vrot.slane %v598, 2
          %v600 = vadd.f32 %v598, %v599
          %v601 = vrot.slane %v600, 1
          %v602 = vadd.f32 %v600, %v601
          %v603 = vadd.f32 %v581, %v582
          %v604 = vrot.slane %v603, 4
          %v605 = vadd.f32 %v603, %v604
          %v606 = vrot.slane %v605, 2
          %v607 = vadd.f32 %v605, %v606
          %v608 = vrot.slane %v607, 1
          %v609 = vadd.f32 %v607, %v608
          %v610 = vadd.f32 %v583, %v584
          %v611 = vrot.slane %v610, 4
          %v612 = vadd.f32 %v610, %v611
          %v613 = vrot.slane %v612, 2
          %v614 = vadd.f32 %v612, %v613
          %v615 = vrot.slane %v614, 1
          %v616 = vadd.f32 %v614, %v615
          %v617 = vadd.f32 %v585, %v586
          %v618 = vrot.slane %v617, 4
          %v619 = vadd.f32 %v617, %v618
          %v620 = vrot.slane %v619, 2
          %v621 = vadd.f32 %v619, %v620
          %v622 = vrot.slane %v621, 1
          %v623 = vadd.f32 %v621, %v622
          %v624 = vadd.f32 %v587, %v588
          %v625 = vrot.slane %v624, 4
          %v626 = vadd.f32 %v624, %v625
          %v627 = vrot.slane %v626, 2
          %v628 = vadd.f32 %v626, %v627
          %v629 = vrot.slane %v628, 1
          %v630 = vadd.f32 %v628, %v629
          %v631 = vadd.f32 %v589, %v590
          %v632 = vrot.slane %v631, 4
          %v633 = vadd.f32 %v631, %v632
          %v634 = vrot.slane %v633, 2
          %v635 = vadd.f32 %v633, %v634
          %v636 = vrot.slane %v635, 1
          %v637 = vadd.f32 %v635, %v636
          %v638 = vadd.f32 %v591, %v592
          %v639 = vrot.slane %v638, 4
          %v640 = vadd.f32 %v638, %v639
          %v641 = vrot.slane %v640, 2
          %v642 = vadd.f32 %v640, %v641
          %v643 = vrot.slane %v642, 1
          %v644 = vadd.f32 %v642, %v643
          %v645 = vadd.f32 %v593, %v594
          %v646 = vrot.slane %v645, 4
          %v647 = vadd.f32 %v645, %v646
          %v648 = vrot.slane %v647, 2
          %v649 = vadd.f32 %v647, %v648
          %v650 = vrot.slane %v649, 1
          %v651 = vadd.f32 %v649, %v650
          %vm660 = vcmask 1041409
          %v661 = vsel %vm660, %v609, %v602
          %vm662 = vcmask 1042434
          %v663 = vsel %vm662, %v616, %v661
          %vm664 = vcmask 1043459
          %v665 = vsel %vm664, %v623, %v663
          %vm666 = vcmask 1044484
          %v667 = vsel %vm666, %v630, %v665
          %vm668 = vcmask 1045509
          %v669 = vsel %vm668, %v637, %v667
          %vm670 = vcmask 1046534
          %v671 = vsel %vm670, %v644, %v669
          %vm672 = vcmask 1047559
          %v673 = vsel %vm672, %v651, %v671
          %v675 = vadd.f32 %v595, %v673
          %676 = vst [vmem:[#allocation2] sm:$0xff] %v675
          %v677 = vld [vmem:[#allocation2] sm:$0xff]
          %v678 = vmul.f32 %v677, 0.041666668
          %v679 = vld [vmem:[#allocation7] sm:$0xff]
          %v680 = vld [vmem:[#allocation9] sm:$0xff]
          %v681 = vld [vmem:[#allocation9 + $0x8] sm:$0xff]
          %v682 = vld [vmem:[#allocation9 + $0x10] sm:$0xff]
          %v683 = vld [vmem:[#allocation9 + $0x18] sm:$0xff]
          %v684 = vld [vmem:[#allocation9 + $0x20] sm:$0xff]
          %v685 = vld [vmem:[#allocation9 + $0x28] sm:$0xff]
          %v686 = vld [vmem:[#allocation9 + $0x30] sm:$0xff]
          %v687 = vld [vmem:[#allocation9 + $0x38] sm:$0xff]
          %v688 = vld [vmem:[#allocation9 + $0x40] sm:$0xff]
          %v689 = vld [vmem:[#allocation9 + $0x48] sm:$0xff]
          %v690 = vld [vmem:[#allocation9 + $0x50] sm:$0xff]
          %v691 = vld [vmem:[#allocation9 + $0x58] sm:$0xff]
          %v692 = vld [vmem:[#allocation9 + $0x60] sm:$0xff]
          %v693 = vld [vmem:[#allocation9 + $0x68] sm:$0xff]
          %v694 = vld [vmem:[#allocation9 + $0x70] sm:$0xff]
          %v695 = vld [vmem:[#allocation9 + $0x78] sm:$0xff]
          %v696 = vld [vmem:[#allocation10] sm:$0xff]
          %v697 = vld [vmem:[#allocation10 + $0x8] sm:$0xff]
          %v698 = vld [vmem:[#allocation10 + $0x10] sm:$0xff]
          %v699 = vld [vmem:[#allocation10 + $0x18] sm:$0xff]
          %v700 = vld [vmem:[#allocation10 + $0x20] sm:$0xff]
          %v701 = vld [vmem:[#allocation10 + $0x28] sm:$0xff]
          %v702 = vld [vmem:[#allocation10 + $0x30] sm:$0xff]
          %v703 = vld [vmem:[#allocation10 + $0x38] sm:$0xff]
          %v704 = vld [vmem:[#allocation10 + $0x40] sm:$0xff]
          %v705 = vld [vmem:[#allocation10 + $0x48] sm:$0xff]
          %v706 = vld [vmem:[#allocation10 + $0x50] sm:$0xff]
          %v707 = vld [vmem:[#allocation10 + $0x58] sm:$0xff]
          %v708 = vld [vmem:[#allocation10 + $0x60] sm:$0xff]
          %v709 = vld [vmem:[#allocation10 + $0x68] sm:$0xff]
          %v710 = vld [vmem:[#allocation10 + $0x70] sm:$0xff]
          %v711 = vld [vmem:[#allocation10 + $0x78] sm:$0xff]
          %712 = vmatpush.msra.mxu0 %v711
          %713 = vmatpush.msra.mxu0 %v710
          %714 = vmatpush.msra.mxu0 %v709
          %715 = vmatpush.msra.mxu0 %v708
          %716 = vmatpush.msra.mxu0 %v707
          %717 = vmatpush.msra.mxu0 %v706
          %718 = vmatpush.msra.mxu0 %v705
          %719 = vmatpush.msra.mxu0 %v704
          %720 = vmatpush.msra.mxu0 %v703
          %721 = vmatpush.msra.mxu0 %v702
          %722 = vmatpush.msra.mxu0 %v701
          %723 = vmatpush.msra.mxu0 %v700
          %724 = vmatpush.msra.mxu0 %v699
          %725 = vmatpush.msra.mxu0 %v698
          %726 = vmatpush.msra.mxu0 %v697
          %727 = vmatpush.msra.mxu0 %v696
          %728 = vmatmul.f32.gmra.mxu0 %v679
          %v729 = vpop.f32.mrf.mxu0
          %v730 = vadd.f32 0.0, %v729
          %731 = vdwg.mxu0
          %732 = vmatpush.msra.mxu0 %v695
          %733 = vmatpush.msra.mxu0 %v694
          %734 = vmatpush.msra.mxu0 %v693
          %735 = vmatpush.msra.mxu0 %v692
          %736 = vmatpush.msra.mxu0 %v691
          %737 = vmatpush.msra.mxu0 %v690
          %738 = vmatpush.msra.mxu0 %v689
          %739 = vmatpush.msra.mxu0 %v688
          %740 = vmatpush.msra.mxu0 %v687
          %741 = vmatpush.msra.mxu0 %v686
          %742 = vmatpush.msra.mxu0 %v685
          %743 = vmatpush.msra.mxu0 %v684
          %744 = vmatpush.msra.mxu0 %v683
          %745 = vmatpush.msra.mxu0 %v682
          %746 = vmatpush.msra.mxu0 %v681
          %747 = vmatpush.msra.mxu0 %v680
          %748 = vmatmul.f32.gmra.mxu0 %v678
          %v749 = vpop.f32.mrf.mxu0
          %v750 = vadd.f32 %v730, %v749
          %751 = vdwg.mxu0
          %v752 = vld [vmem:[%s4] sm:$0x1]
          %v754 = vperm.slane %v752, 0
          %v756 = vadd.f32 %v750, %v754
          %v757 = vmax.f32 %v756, 0.0
          %v758 = vld [vmem:[#allocation12] sm:$0xff]
          %v759 = vld [vmem:[#allocation12 + $0x8] sm:$0xff]
          %v760 = vld [vmem:[#allocation12 + $0x10] sm:$0xff]
          %v761 = vld [vmem:[#allocation12 + $0x18] sm:$0xff]
          %v762 = vld [vmem:[#allocation12 + $0x20] sm:$0xff]
          %v763 = vld [vmem:[#allocation12 + $0x28] sm:$0xff]
          %v764 = vld [vmem:[#allocation12 + $0x30] sm:$0xff]
          %v765 = vld [vmem:[#allocation12 + $0x38] sm:$0xff]
          %v766 = vld [vmem:[#allocation12 + $0x40] sm:$0xff]
          %v767 = vld [vmem:[#allocation12 + $0x48] sm:$0xff]
          %v768 = vld [vmem:[#allocation12 + $0x50] sm:$0xff]
          %v769 = vld [vmem:[#allocation12 + $0x58] sm:$0xff]
          %v770 = vld [vmem:[#allocation12 + $0x60] sm:$0xff]
          %v771 = vld [vmem:[#allocation12 + $0x68] sm:$0xff]
          %v772 = vld [vmem:[#allocation12 + $0x70] sm:$0xff]
          %v773 = vld [vmem:[#allocation12 + $0x78] sm:$0xff]
          %v774 = vld [vmem:[%s6] sm:$0x1]
          %v776 = vperm.slane %v774, 0
          %778 = vmatpush.msra.mxu0 %v773
          %779 = vmatpush.msra.mxu0 %v772
          %780 = vmatpush.msra.mxu0 %v771
          %781 = vmatpush.msra.mxu0 %v770
          %782 = vmatpush.msra.mxu0 %v769
          %783 = vmatpush.msra.mxu0 %v768
          %784 = vmatpush.msra.mxu0 %v767
          %785 = vmatpush.msra.mxu0 %v766
          %786 = vmatpush.msra.mxu0 %v765
          %787 = vmatpush.msra.mxu0 %v764
          %788 = vmatpush.msra.mxu0 %v763
          %789 = vmatpush.msra.mxu0 %v762
          %790 = vmatpush.msra.mxu0 %v761
          %791 = vmatpush.msra.mxu0 %v760
          %792 = vmatpush.msra.mxu0 %v759
          %793 = vmatpush.msra.mxu0 %v758
          %794 = vmatmul.f32.gmra.mxu0 %v757
          %v795 = vpop.f32.mrf.mxu0
          %v796 = vadd.f32 %v776, %v795
          %797 = vdwg.mxu0
          %v798 = vmax.f32 %v796, 0.0
          %v799 = vld [vmem:[%s7] sm:$0x1]
          %s800 = sld [smem:[#allocation3]]
          %v801 = vstv %s800
          %802 = vmatpush.xpose.msra.mxu0 0.0
          %803 = vmatpush.xpose.msra.mxu0 0.0
          %804 = vmatpush.xpose.msra.mxu0 0.0
          %805 = vmatpush.xpose.msra.mxu0 0.0
          %806 = vmatpush.xpose.msra.mxu0 0.0
          %807 = vmatpush.xpose.msra.mxu0 0.0
          %808 = vmatpush.xpose.msra.mxu0 0.0
          %809 = vmatpush.xpose.msra.mxu0 0.0
          %810 = vmatpush.xpose.msra.mxu0 0.0
          %811 = vmatpush.xpose.msra.mxu0 0.0
          %812 = vmatpush.xpose.msra.mxu0 0.0
          %813 = vmatpush.xpose.msra.mxu0 0.0
          %814 = vmatpush.xpose.msra.mxu0 0.0
          %815 = vmatpush.xpose.msra.mxu0 0.0
          %816 = vmatpush.xpose.msra.mxu0 0.0
          %817 = vmatpush.xpose.msra.mxu0 %v798
          %818 = vmatmul.f32.gmra.mxu0 %v799
          %v819 = vpop.f32.mrf.mxu0
          %v820 = vadd.f32 %v801, %v819
          %821 = vdwg.mxu0
          %vm822 = vcmask 57344
          %v823 = vsel %vm822, %v820, -inf
          %824 = vmax.xlane.f32.xlu0 %v823
          %v825 = vpop.xlane.xlu0 %824
          %v826 = vsub.f32 %v820, %v825
          %v827 = vmul.f32 %v826, 1.442695
          %v828 = vpow.pop %v827
          %v829 = vsel %vm822, %v828, 0.0
          %830 = vadd.xlane.f32.xlu0 %v829
          %v831 = vpop.xlane.xlu0 %830
          %v832 = vrcp.pop %v831
          %v833 = vmul.f32 %v831, %v832
          %v834 = vsub.f32 1.0, %v833
          %v835 = vmul.f32 %v832, %v834
          %v836 = vadd.f32 %v832, %v835
          %vm837 = vweird.f32 %v831
          %vm838 = vweird.f32 %v832
          %vm839 = vmor %vm837, %vm838
          %v840 = vsel %vm839, %v832, %v836
          %v841 = vand.u32 2147483647, %v831
          %vm842 = vcmp.eq.f32.partialorder %v841, 8.507059e+37
          %v843 = vand.u32 %v831, 2147483648
          %v844 = vor.u32 1.1754944e-38, %v843
          %v845 = vsel %vm842, %v844, %v840
          %v846 = vmul.f32 %v828, %v845
          %847 = vst.msk [vmem:[#allocation13] sm:$0x1] %vm822, %v846
        $region88: #{tpu_custom_call.1} parent=55 // pred_fallthru
          _
        // Predicated region
        $region89: #{tpu_custom_call.1} parent=55 // pred_check
          %p848 = pneg %p234
        $region90: #{tpu_custom_call.1} parent=55 // pred_check_branch
          %850 = sbr.rel (%p848) target = $region92
        $region91: #{tpu_custom_call.1} parent=55 // pred_region
          %852 = vsyncadd [#allocation6], 0
          %s854 = sshll.u32 [#allocation13], 4
          %s855 = int_to_ptr.vmem [resolvable:$true] %s854
          %s856 = sshll.u32 %s9, 4
          %s857 = int_to_ptr.hbm [resolvable:$true] %s856
          %859 = dma.vmem_to_hbm [thread:$0]  %s855, 16, %s857, [#allocation6]
        $region92: #{tpu_custom_call.1} parent=55 // pred_fallthru
          _
        // Predicated region
        $region93: #{tpu_custom_call.1} parent=55 // pred_check
          %p860 = pneg %p234
        $region94: #{tpu_custom_call.1} parent=55 // pred_check_branch
          %862 = sbr.rel (%p860) target = $region96
        $region95: #{tpu_custom_call.1} parent=55 // pred_region
          %864 = dma.done [#allocation6], 16
        $region96: #{tpu_custom_call.1} parent=55 // pred_fallthru
          _
      $region56: #{tpu_custom_call.1} parent=5 // pred_fallthru
        _
      %p865 = scmp.le.s32.totalorder 2, %s22
      // Predicated region
      $region97: #{tpu_custom_call.1} parent=5 // pred_check
        %p866 = pneg %p865
      $region98: #{tpu_custom_call.1} parent=5 // pred_check_branch
        %868 = sbr.rel (%p866) target = $region100
      $region99: #{tpu_custom_call.1} parent=5 // pred_region
        %s869 = ssub.s32 %s22, 2
      $region100: #{tpu_custom_call.1} parent=5 // pred_fallthru
        _
    $region6: #{tpu_custom_call.1} parent=1 // loop_footer
      %s26 = sadd.s32 1, %s22
    $region7: #{tpu_custom_call.1} parent=1 // loop_footer_branch
      %21 = sbr.rel target = $region3
    $region8: #{tpu_custom_call.1} parent=1 // loop_exit
      _
    %870 = vsyncpa [#allocation5], 1
    %s871 = scalar_lea.sflag [#allocation5], 1
    %872 = vsyncpa %s871, 1
    %873 = vsyncpa [#allocation8], 1
    %874 = vsyncpa [#allocation11], 1
    %875 = vsyncpa [#allocation6], 1
    %s876 = scalar_lea.sflag [#allocation6], 1
    %877 = vsyncpa %s876, 1

</llo_original>
